<compile_context>
chip_gen: v5e
topology: v5e:2x2
jax: 0.10.0
libtpu: 0.0.40
codegen_flags: <defaults>
</compile_context>

<pallas_src>
import functools
import math

import jax
import jax.numpy as jnp
from jax import lax
from jax.experimental import pallas as pl
from jax.experimental.pallas import tpu as pltpu

COMPUTE_DTYPE = jnp.bfloat16          # MXU operand dtype (f32 accumulation)
_VMEM_LIMIT = 48 * 1024 * 1024        # explicit (v5e default 16 MiB), v7x-safe
GELU_APPROX_TANH = False              # optional v5e knob: EUP tanh vs VALU erf
_SQRT_HALF = 1.0 / math.sqrt(2.0)
_GELU_TANH_C = math.sqrt(2.0 / math.pi)


def _gelu_f32(y):
    if GELU_APPROX_TANH:
        # tanh approximation (EUP) -- small deviation from HF exact gelu.
        return 0.5 * y * (1.0 + jnp.tanh(_GELU_TANH_C * (y + 0.044715 * y * y * y)))
    # Exact (erf) GELU, matching HF ACT2FN["gelu"] / torch default.
    return 0.5 * y * (1.0 + lax.erf(y * _SQRT_HALF))


# --------------------------------------------------------------------------
# Fused linear kernels: y = act(x @ W + b)   /   y = LN(x @ W + b + residual)
# --------------------------------------------------------------------------
def _linear_kernel(x_ref, w_ref, b_ref, o_ref, *, activation):
    x = x_ref[...].astype(COMPUTE_DTYPE)          # in-kernel cast (no XLA pass)
    w = w_ref[...].astype(COMPUTE_DTYPE)
    y = jnp.dot(x, w, preferred_element_type=jnp.float32)
    y = y + b_ref[...].astype(jnp.float32)
    if activation == "gelu":
        y = _gelu_f32(y)
    o_ref[...] = y.astype(o_ref.dtype)


def _linear_ln_kernel(x_ref, w_ref, b_ref, r_ref, g_ref, bt_ref, o_ref, *, eps):
    # Dense + bias + residual + LayerNorm fused epilogue (full N row resident).
    x = x_ref[...].astype(COMPUTE_DTYPE)
    w = w_ref[...].astype(COMPUTE_DTYPE)
    y = jnp.dot(x, w, preferred_element_type=jnp.float32)
    y = y + b_ref[...].astype(jnp.float32) + r_ref[...].astype(jnp.float32)
    mean = jnp.mean(y, axis=-1, keepdims=True)
    yc = y - mean
    var = jnp.mean(yc * yc, axis=-1, keepdims=True)
    y = yc * lax.rsqrt(var + eps)
    y = y * g_ref[...].astype(jnp.float32) + bt_ref[...].astype(jnp.float32)
    o_ref[...] = y.astype(o_ref.dtype)


def fused_linear(x2d, w_kn, bias, *, activation=None, out_dtype=COMPUTE_DTYPE,
                 residual=None, gamma=None, beta=None, eps=1e-12,
                 tm=512, tn=1024):
    """y = act(x2d @ w_kn + bias) or LayerNorm(x2d @ w_kn + bias + residual).

    x2d: [M, K]; w_kn: [K, N] (pre-transposed, bf16); bias: [N].
    """
    M, K = x2d.shape
    Kw, N = w_kn.shape
    assert K == Kw, (K, Kw)
    ln_fused = residual is not None

    # Row tiles: full extent when small, else tm (multiple of 8); ragged tail
    # handled by Pallas partial blocks (row-independent math, OOB rows dropped).
    if M <= tm:
        tm_eff, grid_m = M, 1
    else:
        tm_eff, grid_m = tm, pl.cdiv(M, tm)
    # Column tiles: LayerNorm epilogue needs the whole row -> tn = N.
    if ln_fused or N <= tn:
        tn_eff, grid_n = N, 1
    else:
        tn_eff, grid_n = tn, pl.cdiv(N, tn)
    # TODO(synk): K kept whole (fits VMEM for CANINE K<=3072); tile K for larger models.

    b_in = bias.reshape(1, N).astype(jnp.float32)

    in_specs = [
        pl.BlockSpec((tm_eff, K), lambda i, j: (i, 0)),   # activations tile
        pl.BlockSpec((K, tn_eff), lambda i, j: (0, j)),   # weight column tile
        pl.BlockSpec((1, tn_eff), lambda i, j: (0, j)),   # bias tile
    ]
    args = [x2d, w_kn, b_in]
    if ln_fused:
        kernel = functools.partial(_linear_ln_kernel, eps=eps)
        in_specs += [
            pl.BlockSpec((tm_eff, N), lambda i, j: (i, 0)),   # residual row tile
            pl.BlockSpec((1, N), lambda i, j: (0, 0)),        # gamma
            pl.BlockSpec((1, N), lambda i, j: (0, 0)),        # beta
        ]
        args += [residual,
                 gamma.reshape(1, N).astype(jnp.float32),
                 beta.reshape(1, N).astype(jnp.float32)]
        res_bytes = M * N * residual.dtype.itemsize
    else:
        kernel = functools.partial(_linear_kernel, activation=activation)
        res_bytes = 0

    cost = pl.CostEstimate(
        flops=2 * M * K * N,
        transcendentals=(M * N) if activation == "gelu" else 0,
        bytes_accessed=(M * K * x2d.dtype.itemsize
                        + grid_m * K * N * w_kn.dtype.itemsize  # weight re-streamed per row tile
                        + N * 4 + res_bytes
                        + M * N * jnp.dtype(out_dtype).itemsize),
    )

    return pl.pallas_call(
        kernel,
        out_shape=jax.ShapeDtypeStruct((M, N), out_dtype),
        grid_spec=pltpu.PrefetchScalarGridSpec(
            num_scalar_prefetch=0,
            grid=(grid_m, grid_n),
            in_specs=in_specs,
            out_specs=pl.BlockSpec((tm_eff, tn_eff), lambda i, j: (i, j)),
        ),
        compiler_params=pltpu.CompilerParams(
            dimension_semantics=("parallel", "parallel"),
            vmem_limit_bytes=_VMEM_LIMIT,
        ),
        cost_estimate=cost,
    )(*args)


# --------------------------------------------------------------------------
# Multi-head attention, reading lane-dense slabs of the packed [B, S, 3H] QKV
# --------------------------------------------------------------------------
def _attn_one_head(q, k, v, m, scale):
    # q: (tq, D), k/v: (Sk, D), m: (1, Sk) additive key bias.  f32 accumulation.
    s = lax.dot_general(q, k, (((1,), (1,)), ((), ())),
                        preferred_element_type=jnp.float32)
    s = s * scale + m
    smax = jnp.max(s, axis=-1, keepdims=True)
    p = jnp.exp(s - smax)
    denom = jnp.sum(p, axis=-1, keepdims=True)
    ctx = jnp.dot(p.astype(v.dtype), v, preferred_element_type=jnp.float32)
    # Deferred softmax normalization: D-wide multiply + EUP reciprocal instead
    # of an Sk-wide divide on the probability tile.
    return ctx * pl.reciprocal(denom, approx=True)


def _attn_slab_kernel(q_ref, k_ref, v_ref, m_ref, o_ref, *, scale, head_dim,
                      heads_per_blk):
    # q_ref: (1, tq, slab)  k_ref/v_ref: (1, Sk, slab)  m_ref: (1, 1, Sk)
    m = m_ref[0]                                   # (1, Sk)
    outs = []
    for i in range(heads_per_blk):                 # static unroll over paired heads
        sl = slice(i * head_dim, (i + 1) * head_dim)
        outs.append(_attn_one_head(q_ref[0, :, sl], k_ref[0, :, sl],
                                   v_ref[0, :, sl], m, scale))
    out = outs[0] if heads_per_blk == 1 else jnp.concatenate(outs, axis=-1)
    o_ref[0] = out.astype(o_ref.dtype)             # lane-dense (tq, slab) store


def _attn_full_kernel(qkv_ref, m_ref, o_ref, *, scale, head_dim, num_heads, hidden):
    # Small-shape fallback: whole (1, S, 3H) block per batch, all heads unrolled.
    m = m_ref[0]                                   # (1, S)
    outs = []
    for h in range(num_heads):
        q = qkv_ref[0, :, h * head_dim:(h + 1) * head_dim]
        k = qkv_ref[0, :, hidden + h * head_dim: hidden + (h + 1) * head_dim]
        v = qkv_ref[0, :, 2 * hidden + h * head_dim: 2 * hidden + (h + 1) * head_dim]
        outs.append(_attn_one_head(q, k, v, m, scale))
    o_ref[0] = jnp.concatenate(outs, axis=-1).astype(o_ref.dtype)


def multi_head_attention(qkv2d, mask_add, *, batch, seq, num_heads,
                         out_dtype=COMPUTE_DTYPE, tq=256):
    """qkv2d: [B*S, 3H] packed Q|K|V (head-major columns); mask_add: [B, 1, S].

    Returns the context as [B*S, H] (head-major columns), no transposes.
    """
    M, three_h = qkv2d.shape
    H = three_h // 3
    D = H // num_heads
    scale = 1.0 / math.sqrt(D)
    qkv3 = qkv2d.reshape(batch, seq, three_h)      # metadata-only reshape

    # Lane-dense column slab over the packed QKV: 2 heads/step at D=64 (128
    # lanes), 1 head/step if D is already a multiple of 128.
    if D % 128 == 0:
        slab = D
    elif (128 % D == 0) and (H % 128 == 0):
        slab = 128
    else:
        slab = None                                # tiny-shape fallback path

    cost = pl.CostEstimate(
        flops=4 * batch * num_heads * seq * seq * D,
        transcendentals=batch * num_heads * seq * seq,
        bytes_accessed=(batch * seq * three_h * qkv3.dtype.itemsize
                        + batch * seq * 4
                        + batch * seq * H * jnp.dtype(out_dtype).itemsize),
    )

    if slab is not None:
        heads_per_blk = slab // D
        hg = H // slab                             # column blocks per Q/K/V region
        if seq <= tq:
            tq_eff, grid_q = seq, 1
        else:
            tq_eff, grid_q = tq, pl.cdiv(seq, tq)
        kernel = functools.partial(_attn_slab_kernel, scale=scale, head_dim=D,
                                   heads_per_blk=heads_per_blk)
        out = pl.pallas_call(
            kernel,
            out_shape=jax.ShapeDtypeStruct((batch, seq, H), out_dtype),
            grid_spec=pltpu.PrefetchScalarGridSpec(
                num_scalar_prefetch=0,
                grid=(batch, hg, grid_q),
                in_specs=[
                    pl.BlockSpec((1, tq_eff, slab),
                                 lambda b, g, qi: (b, qi, g)),             # Q slab
                    pl.BlockSpec((1, seq, slab),
                                 lambda b, g, qi: (b, 0, hg + g)),         # K slab
                    pl.BlockSpec((1, seq, slab),
                                 lambda b, g, qi: (b, 0, 2 * hg + g)),     # V slab
                    pl.BlockSpec((1, 1, seq),
                                 lambda b, g, qi: (b, 0, 0)),              # key mask
                ],
                out_specs=pl.BlockSpec((1, tq_eff, slab),
                                       lambda b, g, qi: (b, qi, g)),
            ),
            compiler_params=pltpu.CompilerParams(
                dimension_semantics=("parallel", "parallel", "parallel"),
                vmem_limit_bytes=_VMEM_LIMIT,
            ),
            cost_estimate=cost,
        )(qkv3, qkv3, qkv3, mask_add)
    else:
        kernel = functools.partial(_attn_full_kernel, scale=scale, head_dim=D,
                                   num_heads=num_heads, hidden=H)
        out = pl.pallas_call(
            kernel,
            out_shape=jax.ShapeDtypeStruct((batch, seq, H), out_dtype),
            grid_spec=pltpu.PrefetchScalarGridSpec(
                num_scalar_prefetch=0,
                grid=(batch,),
                in_specs=[
                    pl.BlockSpec((1, seq, three_h), lambda b: (b, 0, 0)),
                    pl.BlockSpec((1, 1, seq), lambda b: (b, 0, 0)),
                ],
                out_specs=pl.BlockSpec((1, seq, H), lambda b: (b, 0, 0)),
            ),
            compiler_params=pltpu.CompilerParams(
                dimension_semantics=("parallel",),
                vmem_limit_bytes=_VMEM_LIMIT,
            ),
            cost_estimate=cost,
        )(qkv3, mask_add)

    return out.reshape(M, H)                       # metadata-only reshape


# --------------------------------------------------------------------------
# Encoder forward (composes the kernels)
# --------------------------------------------------------------------------
def _canine_layer_forward(h2d, layer, batch, seq, *, num_heads, eps, mask_add):
    # Fused QKV projection; bf16 output consumed directly by the attention kernel.
    qkv = fused_linear(h2d, layer["w_qkv"], layer["b_qkv"],
                       out_dtype=COMPUTE_DTYPE)                          # [M, 3H]
    ctx2d = multi_head_attention(qkv, mask_add, batch=batch, seq=seq,
                                 num_heads=num_heads,
                                 out_dtype=COMPUTE_DTYPE)                # [M, H]
    # CanineSelfOutput: dense + (dropout no-op) + residual + LayerNorm, fused.
    h1 = fused_linear(ctx2d, layer["w_attn_out"], layer["b_attn_out"],
                      residual=h2d, gamma=layer["ln1_g"], beta=layer["ln1_b"],
                      eps=eps, out_dtype=jnp.float32)
    # CanineIntermediate: dense + exact-erf GELU (fused), bf16 output.
    inter = fused_linear(h1, layer["w_inter"], layer["b_inter"],
                         activation="gelu", out_dtype=COMPUTE_DTYPE)
    # CanineOutput: dense + residual + LayerNorm, fused.
    h2 = fused_linear(inter, layer["w_out"], layer["b_out"],
                      residual=h1, gamma=layer["ln2_g"], beta=layer["ln2_b"],
                      eps=eps, out_dtype=jnp.float32)
    return h2


@functools.partial(jax.jit, static_argnames=("num_attention_heads", "layer_norm_eps"))
def canine_encoder_forward(hidden_states, params, attention_mask=None, *,
                           num_attention_heads, layer_norm_eps=1e-12):
    """hidden_states: [B, S, H]; attention_mask: [B, S] (1=keep, 0=pad) or None."""
    B, S, H = hidden_states.shape
    h2d = hidden_states.reshape(B * S, H).astype(jnp.float32)
    if attention_mask is None:
        mask_add = jnp.zeros((B, 1, S), jnp.float32)
    else:
        # HF semantics: additive key bias (1 - mask) * finfo.min
        mask_add = (1.0 - attention_mask.astype(jnp.float32).reshape(B, 1, S)) \
                   * jnp.finfo(jnp.float32).min
    for layer in params:
        h2d = _canine_layer_forward(h2d, layer, B, S,
                                    num_heads=num_attention_heads,
                                    eps=layer_norm_eps, mask_add=mask_add)
    return h2d.reshape(B, S, H)


# --------------------------------------------------------------------------
# Parameter helpers
# --------------------------------------------------------------------------
def init_torch_layout_params(key, *, num_layers, hidden_size, intermediate_size):
    """Deterministic params in torch nn.Linear layout (W:[out,in], b:[out]), f32."""
    layers = []
    for _ in range(num_layers):
        ks = jax.random.split(key, 18)
        key = ks[0]
        lin = lambda k, o, i: jax.random.normal(k, (o, i), jnp.float32) * 0.02
        vec = lambda k, n: jax.random.normal(k, (n,), jnp.float32) * 0.02
        layers.append({
            "wq": lin(ks[1], hidden_size, hidden_size), "bq": vec(ks[2], hidden_size),
            "wk": lin(ks[3], hidden_size, hidden_size), "bk": vec(ks[4], hidden_size),
            "wv": lin(ks[5], hidden_size, hidden_size), "bv": vec(ks[6], hidden_size),
            "wo": lin(ks[7], hidden_size, hidden_size), "bo": vec(ks[8], hidden_size),
            "ln1_g": 1.0 + 0.1 * jax.random.normal(ks[9], (hidden_size,), jnp.float32),
            "ln1_b": 0.1 * jax.random.normal(ks[10], (hidden_size,), jnp.float32),
            "wi": lin(ks[11], intermediate_size, hidden_size), "bi": vec(ks[12], intermediate_size),
            "wo2": lin(ks[13], hidden_size, intermediate_size), "bo2": vec(ks[14], hidden_size),
            "ln2_g": 1.0 + 0.1 * jax.random.normal(ks[15], (hidden_size,), jnp.float32),
            "ln2_b": 0.1 * jax.random.normal(ks[16], (hidden_size,), jnp.float32),
        })
    return layers


def prepare_kernel_params(torch_params, compute_dtype=COMPUTE_DTYPE):
    """One-time: transpose weights to [in, out] and cast to bf16 (hoisted out of forward)."""
    prepared = []
    for p in torch_params:
        w_qkv = jnp.concatenate([p["wq"], p["wk"], p["wv"]], axis=0)   # [3H, H] torch layout
        prepared.append({
            "w_qkv": jnp.asarray(w_qkv.T, dtype=compute_dtype),        # [H, 3H] = Q|K|V cols
            "b_qkv": jnp.concatenate([p["bq"], p["bk"], p["bv"]]),
            "w_attn_out": jnp.asarray(p["wo"].T, dtype=compute_dtype),
            "b_attn_out": p["bo"],
            "ln1_g": p["ln1_g"], "ln1_b": p["ln1_b"],
            "w_inter": jnp.asarray(p["wi"].T, dtype=compute_dtype),
            "b_inter": p["bi"],
            "w_out": jnp.asarray(p["wo2"].T, dtype=compute_dtype),
            "b_out": p["bo2"],
            "ln2_g": p["ln2_g"], "ln2_b": p["ln2_b"],
        })
    return prepared


# --------------------------------------------------------------------------
# Pure-JAX f32 reference (mirrors the PyTorch module exactly)
# --------------------------------------------------------------------------
def _reference_encoder(hidden_states, torch_params, attention_mask, *, num_heads, eps):
    B, S, H = hidden_states.shape
    D = H // num_heads
    if attention_mask is not None:
        add_mask = (1.0 - attention_mask.astype(jnp.float32))[:, None, None, :] \
                   * jnp.finfo(jnp.float32).min
    else:
        add_mask = 0.0

    def layernorm(x, g, b):
        mu = x.mean(-1, keepdims=True)
        var = ((x - mu) ** 2).mean(-1, keepdims=True)
        return (x - mu) / jnp.sqrt(var + eps) * g + b

    def linear(x, w, b):
        return jnp.einsum("...i,oi->...o", x, w) + b

    h = hidden_states.astype(jnp.float32)
    for p in torch_params:
        q = linear(h, p["wq"], p["bq"]).reshape(B, S, num_heads, D).transpose(0, 2, 1, 3)
        k = linear(h, p["wk"], p["bk"]).reshape(B, S, num_heads, D).transpose(0, 2, 1, 3)
        v = linear(h, p["wv"], p["bv"]).reshape(B, S, num_heads, D).transpose(0, 2, 1, 3)
        scores = jnp.einsum("bhqd,bhkd->bhqk", q, k) / math.sqrt(D) + add_mask
        probs = jax.nn.softmax(scores, axis=-1)
        ctx = jnp.einsum("bhqk,bhkd->bhqd", probs, v).transpose(0, 2, 1, 3).reshape(B, S, H)
        attn = layernorm(linear(ctx, p["wo"], p["bo"]) + h, p["ln1_g"], p["ln1_b"])
        inter = linear(attn, p["wi"], p["bi"])
        inter = 0.5 * inter * (1.0 + lax.erf(inter / math.sqrt(2.0)))
        h = layernorm(linear(inter, p["wo2"], p["bo2"]) + attn, p["ln2_g"], p["ln2_b"])
    return h


if __name__ == "__main__":
    # Small config consistent with the module.
    batch, seq, hidden_size, intermediate_size = 2, 8, 32, 64
    num_heads, num_layers, eps = 4, 2, 1e-12

    key = jax.random.PRNGKey(0)
    k_x, k_p = jax.random.split(key)
    hidden_states = jax.random.normal(k_x, (batch, seq, hidden_size), jnp.float32)
    attention_mask = jnp.ones((batch, seq), jnp.float32)

    torch_params = init_torch_layout_params(
        k_p, num_layers=num_layers, hidden_size=hidden_size,
        intermediate_size=intermediate_size)
    kernel_params = prepare_kernel_params(torch_params)

    out = canine_encoder_forward(hidden_states, kernel_params, attention_mask,
                                 num_attention_heads=num_heads,
                                 layer_norm_eps=eps)
    out = jax.block_until_ready(out)

    ref = _reference_encoder(hidden_states, torch_params, attention_mask,
                             num_heads=num_heads, eps=eps)
    assert out.shape == (batch, seq, hidden_size)
    max_err = float(jnp.max(jnp.abs(out - ref)))
    # bf16 MXU operands / bf16 intermediate stores / approx-EUP reciprocal in the
    # softmax normalization vs a pure-f32 reference -> small numerical drift.
    assert max_err < 3e-2, f"mismatch vs reference, max abs err = {max_err}"
    print("KERNEL_OK")
</pallas_src>

<mosaic_0001>
module attributes {stable_mosaic.version = 11 : i64} {
  func.func @_attn_full_kernel(%arg0: i32, %arg1: memref<1x8x96xbf16, #tpu.memory_space<vmem>>, %arg2: memref<1x1x8xf32, #tpu.memory_space<vmem>>, %arg3: memref<1x8x32xbf16, #tpu.memory_space<vmem>>) attributes {dimension_semantics = [#tpu.dimension_semantics<parallel>], iteration_bounds = array<i64: 2>, scalar_prefetch = 0 : i64, scratch_operands = 0 : i64, tpu.core_type = #tpu.core_type<tc>, window_params = [{transform_indices = @transform_0, window_bounds = array<i64: 1, 8, 96>}, {transform_indices = @transform_1, window_bounds = array<i64: 1, 1, 8>}, {transform_indices = @transform_2, window_bounds = array<i64: 1, 8, 32>}]} {
    %c0 = arith.constant 0 : index
    %c0_0 = arith.constant 0 : index
    %c0_1 = arith.constant 0 : index
    %0 = vector.load %arg2[%c0, %c0_0, %c0_1] : memref<1x1x8xf32, #tpu.memory_space<vmem>>, vector<1x1x8xf32>
    %1 = vector.shape_cast %0 : vector<1x1x8xf32> to vector<1x8xf32>
    %c0_2 = arith.constant 0 : index
    %c0_3 = arith.constant 0 : index
    %c0_4 = arith.constant 0 : index
    %2 = vector.load %arg1[%c0_2, %c0_3, %c0_4] : memref<1x8x96xbf16, #tpu.memory_space<vmem>>, vector<1x8x8xbf16>
    %3 = vector.shape_cast %2 : vector<1x8x8xbf16> to vector<8x8xbf16>
    %c0_5 = arith.constant 0 : index
    %c0_6 = arith.constant 0 : index
    %c32 = arith.constant 32 : index
    %4 = vector.load %arg1[%c0_5, %c0_6, %c32] : memref<1x8x96xbf16, #tpu.memory_space<vmem>>, vector<1x8x8xbf16>
    %5 = vector.shape_cast %4 : vector<1x8x8xbf16> to vector<8x8xbf16>
    %c0_7 = arith.constant 0 : index
    %c0_8 = arith.constant 0 : index
    %c64 = arith.constant 64 : index
    %6 = vector.load %arg1[%c0_7, %c0_8, %c64] : memref<1x8x96xbf16, #tpu.memory_space<vmem>>, vector<1x8x8xbf16>
    %7 = vector.shape_cast %6 : vector<1x8x8xbf16> to vector<8x8xbf16>
    %cst = arith.constant dense<0.000000e+00> : vector<8x8xf32>
    %8 = tpu.matmul %3, %5, %cst {dimension_numbers = #tpu.dot_dimension_numbers<[1], [1], [0], [0], [0, 0, 1, 0], [], []>} : vector<8x8xbf16>, vector<8x8xbf16>, vector<8x8xf32> -> vector<8x8xf32>
    %cst_9 = arith.constant 0.353553385 : f32
    %9 = vector.broadcast %cst_9 : f32 to vector<8x8xf32>
    %10 = arith.mulf %8, %9 : vector<8x8xf32>
    %11 = vector.broadcast %1 : vector<1x8xf32> to vector<8x8xf32>
    %12 = arith.addf %10, %11 : vector<8x8xf32>
    %cst_10 = arith.constant dense<0xFF800000> : vector<8xf32>
    %13 = vector.multi_reduction <maximumf>, %12, %cst_10 [1] : vector<8x8xf32> to vector<8xf32>
    %14 = vector.shape_cast %13 : vector<8xf32> to vector<8x1xf32>
    %15 = vector.broadcast %14 : vector<8x1xf32> to vector<8x8xf32>
    %16 = arith.subf %12, %15 : vector<8x8xf32>
    %17 = math.exp %16 : vector<8x8xf32>
    %cst_11 = arith.constant dense<0.000000e+00> : vector<8xf32>
    %18 = vector.multi_reduction <add>, %17, %cst_11 [1] : vector<8x8xf32> to vector<8xf32>
    %19 = vector.shape_cast %18 : vector<8xf32> to vector<8x1xf32>
    %20 = arith.truncf %17 : vector<8x8xf32> to vector<8x8xbf16>
    %cst_12 = arith.constant dense<0.000000e+00> : vector<8x8xf32>
    %21 = tpu.matmul %20, %7, %cst_12 {dimension_numbers = #tpu.dot_dimension_numbers<[1], [0], [0], [1], [0, 0, 1, 1], [], []>} : vector<8x8xbf16>, vector<8x8xbf16>, vector<8x8xf32> -> vector<8x8xf32>
    %22 = tpu.reciprocal %19 {approx = true} : vector<8x1xf32> -> vector<8x1xf32>
    %23 = vector.broadcast %22 : vector<8x1xf32> to vector<8x8xf32>
    %24 = arith.mulf %21, %23 : vector<8x8xf32>
    %c0_13 = arith.constant 0 : index
    %c0_14 = arith.constant 0 : index
    %c8 = arith.constant 8 : index
    %25 = vector.load %arg1[%c0_13, %c0_14, %c8] : memref<1x8x96xbf16, #tpu.memory_space<vmem>>, vector<1x8x8xbf16>
    %26 = vector.shape_cast %25 : vector<1x8x8xbf16> to vector<8x8xbf16>
    %c0_15 = arith.constant 0 : index
    %c0_16 = arith.constant 0 : index
    %c40 = arith.constant 40 : index
    %27 = vector.load %arg1[%c0_15, %c0_16, %c40] : memref<1x8x96xbf16, #tpu.memory_space<vmem>>, vector<1x8x8xbf16>
    %28 = vector.shape_cast %27 : vector<1x8x8xbf16> to vector<8x8xbf16>
    %c0_17 = arith.constant 0 : index
    %c0_18 = arith.constant 0 : index
    %c72 = arith.constant 72 : index
    %29 = vector.load %arg1[%c0_17, %c0_18, %c72] : memref<1x8x96xbf16, #tpu.memory_space<vmem>>, vector<1x8x8xbf16>
    %30 = vector.shape_cast %29 : vector<1x8x8xbf16> to vector<8x8xbf16>
    %cst_19 = arith.constant dense<0.000000e+00> : vector<8x8xf32>
    %31 = tpu.matmul %26, %28, %cst_19 {dimension_numbers = #tpu.dot_dimension_numbers<[1], [1], [0], [0], [0, 0, 1, 0], [], []>} : vector<8x8xbf16>, vector<8x8xbf16>, vector<8x8xf32> -> vector<8x8xf32>
    %cst_20 = arith.constant 0.353553385 : f32
    %32 = vector.broadcast %cst_20 : f32 to vector<8x8xf32>
    %33 = arith.mulf %31, %32 : vector<8x8xf32>
    %34 = vector.broadcast %1 : vector<1x8xf32> to vector<8x8xf32>
    %35 = arith.addf %33, %34 : vector<8x8xf32>
    %cst_21 = arith.constant dense<0xFF800000> : vector<8xf32>
    %36 = vector.multi_reduction <maximumf>, %35, %cst_21 [1] : vector<8x8xf32> to vector<8xf32>
    %37 = vector.shape_cast %36 : vector<8xf32> to vector<8x1xf32>
    %38 = vector.broadcast %37 : vector<8x1xf32> to vector<8x8xf32>
    %39 = arith.subf %35, %38 : vector<8x8xf32>
    %40 = math.exp %39 : vector<8x8xf32>
    %cst_22 = arith.constant dense<0.000000e+00> : vector<8xf32>
    %41 = vector.multi_reduction <add>, %40, %cst_22 [1] : vector<8x8xf32> to vector<8xf32>
    %42 = vector.shape_cast %41 : vector<8xf32> to vector<8x1xf32>
    %43 = arith.truncf %40 : vector<8x8xf32> to vector<8x8xbf16>
    %cst_23 = arith.constant dense<0.000000e+00> : vector<8x8xf32>
    %44 = tpu.matmul %43, %30, %cst_23 {dimension_numbers = #tpu.dot_dimension_numbers<[1], [0], [0], [1], [0, 0, 1, 1], [], []>} : vector<8x8xbf16>, vector<8x8xbf16>, vector<8x8xf32> -> vector<8x8xf32>
    %45 = tpu.reciprocal %42 {approx = true} : vector<8x1xf32> -> vector<8x1xf32>
    %46 = vector.broadcast %45 : vector<8x1xf32> to vector<8x8xf32>
    %47 = arith.mulf %44, %46 : vector<8x8xf32>
    %c0_24 = arith.constant 0 : index
    %c0_25 = arith.constant 0 : index
    %c16 = arith.constant 16 : index
    %48 = vector.load %arg1[%c0_24, %c0_25, %c16] : memref<1x8x96xbf16, #tpu.memory_space<vmem>>, vector<1x8x8xbf16>
    %49 = vector.shape_cast %48 : vector<1x8x8xbf16> to vector<8x8xbf16>
    %c0_26 = arith.constant 0 : index
    %c0_27 = arith.constant 0 : index
    %c48 = arith.constant 48 : index
    %50 = vector.load %arg1[%c0_26, %c0_27, %c48] : memref<1x8x96xbf16, #tpu.memory_space<vmem>>, vector<1x8x8xbf16>
    %51 = vector.shape_cast %50 : vector<1x8x8xbf16> to vector<8x8xbf16>
    %c0_28 = arith.constant 0 : index
    %c0_29 = arith.constant 0 : index
    %c80 = arith.constant 80 : index
    %52 = vector.load %arg1[%c0_28, %c0_29, %c80] : memref<1x8x96xbf16, #tpu.memory_space<vmem>>, vector<1x8x8xbf16>
    %53 = vector.shape_cast %52 : vector<1x8x8xbf16> to vector<8x8xbf16>
    %cst_30 = arith.constant dense<0.000000e+00> : vector<8x8xf32>
    %54 = tpu.matmul %49, %51, %cst_30 {dimension_numbers = #tpu.dot_dimension_numbers<[1], [1], [0], [0], [0, 0, 1, 0], [], []>} : vector<8x8xbf16>, vector<8x8xbf16>, vector<8x8xf32> -> vector<8x8xf32>
    %cst_31 = arith.constant 0.353553385 : f32
    %55 = vector.broadcast %cst_31 : f32 to vector<8x8xf32>
    %56 = arith.mulf %54, %55 : vector<8x8xf32>
    %57 = vector.broadcast %1 : vector<1x8xf32> to vector<8x8xf32>
    %58 = arith.addf %56, %57 : vector<8x8xf32>
    %cst_32 = arith.constant dense<0xFF800000> : vector<8xf32>
    %59 = vector.multi_reduction <maximumf>, %58, %cst_32 [1] : vector<8x8xf32> to vector<8xf32>
    %60 = vector.shape_cast %59 : vector<8xf32> to vector<8x1xf32>
    %61 = vector.broadcast %60 : vector<8x1xf32> to vector<8x8xf32>
    %62 = arith.subf %58, %61 : vector<8x8xf32>
    %63 = math.exp %62 : vector<8x8xf32>
    %cst_33 = arith.constant dense<0.000000e+00> : vector<8xf32>
    %64 = vector.multi_reduction <add>, %63, %cst_33 [1] : vector<8x8xf32> to vector<8xf32>
    %65 = vector.shape_cast %64 : vector<8xf32> to vector<8x1xf32>
    %66 = arith.truncf %63 : vector<8x8xf32> to vector<8x8xbf16>
    %cst_34 = arith.constant dense<0.000000e+00> : vector<8x8xf32>
    %67 = tpu.matmul %66, %53, %cst_34 {dimension_numbers = #tpu.dot_dimension_numbers<[1], [0], [0], [1], [0, 0, 1, 1], [], []>} : vector<8x8xbf16>, vector<8x8xbf16>, vector<8x8xf32> -> vector<8x8xf32>
    %68 = tpu.reciprocal %65 {approx = true} : vector<8x1xf32> -> vector<8x1xf32>
    %69 = vector.broadcast %68 : vector<8x1xf32> to vector<8x8xf32>
    %70 = arith.mulf %67, %69 : vector<8x8xf32>
    %c0_35 = arith.constant 0 : index
    %c0_36 = arith.constant 0 : index
    %c24 = arith.constant 24 : index
    %71 = vector.load %arg1[%c0_35, %c0_36, %c24] : memref<1x8x96xbf16, #tpu.memory_space<vmem>>, vector<1x8x8xbf16>
    %72 = vector.shape_cast %71 : vector<1x8x8xbf16> to vector<8x8xbf16>
    %c0_37 = arith.constant 0 : index
    %c0_38 = arith.constant 0 : index
    %c56 = arith.constant 56 : index
    %73 = vector.load %arg1[%c0_37, %c0_38, %c56] : memref<1x8x96xbf16, #tpu.memory_space<vmem>>, vector<1x8x8xbf16>
    %74 = vector.shape_cast %73 : vector<1x8x8xbf16> to vector<8x8xbf16>
    %c0_39 = arith.constant 0 : index
    %c0_40 = arith.constant 0 : index
    %c88 = arith.constant 88 : index
    %75 = vector.load %arg1[%c0_39, %c0_40, %c88] : memref<1x8x96xbf16, #tpu.memory_space<vmem>>, vector<1x8x8xbf16>
    %76 = vector.shape_cast %75 : vector<1x8x8xbf16> to vector<8x8xbf16>
    %cst_41 = arith.constant dense<0.000000e+00> : vector<8x8xf32>
    %77 = tpu.matmul %72, %74, %cst_41 {dimension_numbers = #tpu.dot_dimension_numbers<[1], [1], [0], [0], [0, 0, 1, 0], [], []>} : vector<8x8xbf16>, vector<8x8xbf16>, vector<8x8xf32> -> vector<8x8xf32>
    %cst_42 = arith.constant 0.353553385 : f32
    %78 = vector.broadcast %cst_42 : f32 to vector<8x8xf32>
    %79 = arith.mulf %77, %78 : vector<8x8xf32>
    %80 = vector.broadcast %1 : vector<1x8xf32> to vector<8x8xf32>
    %81 = arith.addf %79, %80 : vector<8x8xf32>
    %cst_43 = arith.constant dense<0xFF800000> : vector<8xf32>
    %82 = vector.multi_reduction <maximumf>, %81, %cst_43 [1] : vector<8x8xf32> to vector<8xf32>
    %83 = vector.shape_cast %82 : vector<8xf32> to vector<8x1xf32>
    %84 = vector.broadcast %83 : vector<8x1xf32> to vector<8x8xf32>
    %85 = arith.subf %81, %84 : vector<8x8xf32>
    %86 = math.exp %85 : vector<8x8xf32>
    %cst_44 = arith.constant dense<0.000000e+00> : vector<8xf32>
    %87 = vector.multi_reduction <add>, %86, %cst_44 [1] : vector<8x8xf32> to vector<8xf32>
    %88 = vector.shape_cast %87 : vector<8xf32> to vector<8x1xf32>
    %89 = arith.truncf %86 : vector<8x8xf32> to vector<8x8xbf16>
    %cst_45 = arith.constant dense<0.000000e+00> : vector<8x8xf32>
    %90 = tpu.matmul %89, %76, %cst_45 {dimension_numbers = #tpu.dot_dimension_numbers<[1], [0], [0], [1], [0, 0, 1, 1], [], []>} : vector<8x8xbf16>, vector<8x8xbf16>, vector<8x8xf32> -> vector<8x8xf32>
    %91 = tpu.reciprocal %88 {approx = true} : vector<8x1xf32> -> vector<8x1xf32>
    %92 = vector.broadcast %91 : vector<8x1xf32> to vector<8x8xf32>
    %93 = arith.mulf %90, %92 : vector<8x8xf32>
    %94 = tpu.concatenate %24, %47, %70, %93 in 1 : vector<8x8xf32>, vector<8x8xf32>, vector<8x8xf32>, vector<8x8xf32> -> vector<8x32xf32>
    %95 = arith.truncf %94 : vector<8x32xf32> to vector<8x32xbf16>
    %c0_46 = arith.constant 0 : index
    %c0_47 = arith.constant 0 : index
    %c0_48 = arith.constant 0 : index
    %96 = vector.load %arg3[%c0_46, %c0_47, %c0_48] : memref<1x8x32xbf16, #tpu.memory_space<vmem>>, vector<1x8x32xbf16>
    %97 = vector.shape_cast %96 : vector<1x8x32xbf16> to vector<8x32xbf16>
    %98 = vector.shape_cast %95 : vector<8x32xbf16> to vector<1x8x32xbf16>
    tpu.vector_store %arg3[%c0_46, %c0_47, %c0_48], %98 {strides = array<i32>} : memref<1x8x32xbf16, #tpu.memory_space<vmem>>, vector<1x8x32xbf16>,
    return
  }
  func.func @transform_0(%arg0: i32) -> (i32, i32, i32) {
    %c0_i32 = arith.constant 0 : i32
    %c0_i32_0 = arith.constant 0 : i32
    %c0_i32_1 = arith.constant 0 : i32
    return %arg0, %c0_i32, %c0_i32_0 : i32, i32, i32
  }
  func.func @transform_1(%arg0: i32) -> (i32, i32, i32) {
    %c0_i32 = arith.constant 0 : i32
    %c0_i32_0 = arith.constant 0 : i32
    %c0_i32_1 = arith.constant 0 : i32
    return %arg0, %c0_i32, %c0_i32_0 : i32, i32, i32
  }
  func.func @transform_2(%arg0: i32) -> (i32, i32, i32) {
    %c0_i32 = arith.constant 0 : i32
    %c0_i32_0 = arith.constant 0 : i32
    %c0_i32_1 = arith.constant 0 : i32
    return %arg0, %c0_i32, %c0_i32_0 : i32, i32, i32
  }
}

module attributes {stable_mosaic.version = 11 : i64} {
  func.func @_linear_ln_kernel(%arg0: i32, %arg1: i32, %arg2: memref<16x32xbf16, #tpu.memory_space<vmem>>, %arg3: memref<32x32xbf16, #tpu.memory_space<vmem>>, %arg4: memref<1x32xf32, #tpu.memory_space<vmem>>, %arg5: memref<16x32xf32, #tpu.memory_space<vmem>>, %arg6: memref<1x32xf32, #tpu.memory_space<vmem>>, %arg7: memref<1x32xf32, #tpu.memory_space<vmem>>, %arg8: memref<16x32xf32, #tpu.memory_space<vmem>>) attributes {dimension_semantics = [#tpu.dimension_semantics<parallel>, #tpu.dimension_semantics<parallel>], iteration_bounds = array<i64: 1, 1>, scalar_prefetch = 0 : i64, scratch_operands = 0 : i64, tpu.core_type = #tpu.core_type<tc>, window_params = [{transform_indices = @transform_0, window_bounds = array<i64: 16, 32>}, {transform_indices = @transform_1, window_bounds = array<i64: 32, 32>}, {transform_indices = @transform_2, window_bounds = array<i64: 1, 32>}, {transform_indices = @transform_3, window_bounds = array<i64: 16, 32>}, {pipeline_mode = #tpu.pipeline_mode<synchronous>, transform_indices = @transform_4, window_bounds = array<i64: 1, 32>}, {pipeline_mode = #tpu.pipeline_mode<synchronous>, transform_indices = @transform_5, window_bounds = array<i64: 1, 32>}, {transform_indices = @transform_6, window_bounds = array<i64: 16, 32>}]} {
    %c0 = arith.constant 0 : index
    %c0_0 = arith.constant 0 : index
    %0 = vector.load %arg2[%c0, %c0_0] : memref<16x32xbf16, #tpu.memory_space<vmem>>, vector<16x32xbf16>
    %c0_1 = arith.constant 0 : index
    %c0_2 = arith.constant 0 : index
    %1 = vector.load %arg3[%c0_1, %c0_2] : memref<32x32xbf16, #tpu.memory_space<vmem>>, vector<32x32xbf16>
    %cst = arith.constant dense<0.000000e+00> : vector<16x32xf32>
    %2 = tpu.matmul %0, %1, %cst {dimension_numbers = #tpu.dot_dimension_numbers<[1], [0], [0], [1], [0, 0, 1, 1], [], []>} : vector<16x32xbf16>, vector<32x32xbf16>, vector<16x32xf32> -> vector<16x32xf32>
    %c0_3 = arith.constant 0 : index
    %c0_4 = arith.constant 0 : index
    %3 = vector.load %arg4[%c0_3, %c0_4] : memref<1x32xf32, #tpu.memory_space<vmem>>, vector<1x32xf32>
    %4 = vector.broadcast %3 : vector<1x32xf32> to vector<16x32xf32>
    %5 = arith.addf %2, %4 : vector<16x32xf32>
    %c0_5 = arith.constant 0 : index
    %c0_6 = arith.constant 0 : index
    %6 = vector.load %arg5[%c0_5, %c0_6] : memref<16x32xf32, #tpu.memory_space<vmem>>, vector<16x32xf32>
    %7 = arith.addf %5, %6 : vector<16x32xf32>
    %cst_7 = arith.constant dense<0.000000e+00> : vector<16xf32>
    %8 = vector.multi_reduction <add>, %7, %cst_7 [1] : vector<16x32xf32> to vector<16xf32>
    %9 = vector.shape_cast %8 : vector<16xf32> to vector<16x1xf32>
    %cst_8 = arith.constant 3.200000e+01 : f32
    %10 = vector.broadcast %cst_8 : f32 to vector<16x1xf32>
    %11 = arith.divf %9, %10 : vector<16x1xf32>
    %12 = vector.broadcast %11 : vector<16x1xf32> to vector<16x32xf32>
    %13 = arith.subf %7, %12 : vector<16x32xf32>
    %14 = arith.mulf %13, %13 : vector<16x32xf32>
    %cst_9 = arith.constant dense<0.000000e+00> : vector<16xf32>
    %15 = vector.multi_reduction <add>, %14, %cst_9 [1] : vector<16x32xf32> to vector<16xf32>
    %16 = vector.shape_cast %15 : vector<16xf32> to vector<16x1xf32>
    %cst_10 = arith.constant 3.200000e+01 : f32
    %17 = vector.broadcast %cst_10 : f32 to vector<16x1xf32>
    %18 = arith.divf %16, %17 : vector<16x1xf32>
    %cst_11 = arith.constant 9.99999996E-13 : f32
    %19 = vector.broadcast %cst_11 : f32 to vector<16x1xf32>
    %20 = arith.addf %18, %19 : vector<16x1xf32>
    %21 = math.rsqrt %20 : vector<16x1xf32>
    %22 = vector.broadcast %21 : vector<16x1xf32> to vector<16x32xf32>
    %23 = arith.mulf %13, %22 : vector<16x32xf32>
    %c0_12 = arith.constant 0 : index
    %c0_13 = arith.constant 0 : index
    %24 = vector.load %arg6[%c0_12, %c0_13] : memref<1x32xf32, #tpu.memory_space<vmem>>, vector<1x32xf32>
    %25 = vector.broadcast %24 : vector<1x32xf32> to vector<16x32xf32>
    %26 = arith.mulf %23, %25 : vector<16x32xf32>
    %c0_14 = arith.constant 0 : index
    %c0_15 = arith.constant 0 : index
    %27 = vector.load %arg7[%c0_14, %c0_15] : memref<1x32xf32, #tpu.memory_space<vmem>>, vector<1x32xf32>
    %28 = vector.broadcast %27 : vector<1x32xf32> to vector<16x32xf32>
    %29 = arith.addf %26, %28 : vector<16x32xf32>
    %c0_16 = arith.constant 0 : index
    %c0_17 = arith.constant 0 : index
    %30 = vector.load %arg8[%c0_16, %c0_17] : memref<16x32xf32, #tpu.memory_space<vmem>>, vector<16x32xf32>
    tpu.vector_store %arg8[%c0_16, %c0_17], %29 {strides = array<i32>} : memref<16x32xf32, #tpu.memory_space<vmem>>, vector<16x32xf32>,
    return
  }
  func.func @transform_0(%arg0: i32, %arg1: i32) -> (i32, i32) {
    %c0_i32 = arith.constant 0 : i32
    %c0_i32_0 = arith.constant 0 : i32
    return %arg0, %c0_i32 : i32, i32
  }
  func.func @transform_1(%arg0: i32, %arg1: i32) -> (i32, i32) {
    %c0_i32 = arith.constant 0 : i32
    %c0_i32_0 = arith.constant 0 : i32
    return %c0_i32, %arg1 : i32, i32
  }
  func.func @transform_2(%arg0: i32, %arg1: i32) -> (i32, i32) {
    %c0_i32 = arith.constant 0 : i32
    %c0_i32_0 = arith.constant 0 : i32
    return %c0_i32, %arg1 : i32, i32
  }
  func.func @transform_3(%arg0: i32, %arg1: i32) -> (i32, i32) {
    %c0_i32 = arith.constant 0 : i32
    %c0_i32_0 = arith.constant 0 : i32
    return %arg0, %c0_i32 : i32, i32
  }
  func.func @transform_4(%arg0: i32, %arg1: i32) -> (i32, i32) {
    %c0_i32 = arith.constant 0 : i32
    %c0_i32_0 = arith.constant 0 : i32
    %c0_i32_1 = arith.constant 0 : i32
    return %c0_i32, %c0_i32_0 : i32, i32
  }
  func.func @transform_5(%arg0: i32, %arg1: i32) -> (i32, i32) {
    %c0_i32 = arith.constant 0 : i32
    %c0_i32_0 = arith.constant 0 : i32
    %c0_i32_1 = arith.constant 0 : i32
    return %c0_i32, %c0_i32_0 : i32, i32
  }
  func.func @transform_6(%arg0: i32, %arg1: i32) -> (i32, i32) {
    %c0_i32 = arith.constant 0 : i32
    return %arg0, %arg1 : i32, i32
  }
}

module attributes {stable_mosaic.version = 11 : i64} {
  func.func @_linear_kernel(%arg0: i32, %arg1: i32, %arg2: memref<16x32xf32, #tpu.memory_space<vmem>>, %arg3: memref<32x96xbf16, #tpu.memory_space<vmem>>, %arg4: memref<1x96xf32, #tpu.memory_space<vmem>>, %arg5: memref<16x96xbf16, #tpu.memory_space<vmem>>) attributes {dimension_semantics = [#tpu.dimension_semantics<parallel>, #tpu.dimension_semantics<parallel>], iteration_bounds = array<i64: 1, 1>, scalar_prefetch = 0 : i64, scratch_operands = 0 : i64, tpu.core_type = #tpu.core_type<tc>, window_params = [{transform_indices = @transform_0, window_bounds = array<i64: 16, 32>}, {transform_indices = @transform_1, window_bounds = array<i64: 32, 96>}, {transform_indices = @transform_2, window_bounds = array<i64: 1, 96>}, {transform_indices = @transform_3, window_bounds = array<i64: 16, 96>}]} {
    %c0 = arith.constant 0 : index
    %c0_0 = arith.constant 0 : index
    %0 = vector.load %arg2[%c0, %c0_0] : memref<16x32xf32, #tpu.memory_space<vmem>>, vector<16x32xf32>
    %1 = arith.truncf %0 : vector<16x32xf32> to vector<16x32xbf16>
    %c0_1 = arith.constant 0 : index
    %c0_2 = arith.constant 0 : index
    %2 = vector.load %arg3[%c0_1, %c0_2] : memref<32x96xbf16, #tpu.memory_space<vmem>>, vector<32x96xbf16>
    %cst = arith.constant dense<0.000000e+00> : vector<16x96xf32>
    %3 = tpu.matmul %1, %2, %cst {dimension_numbers = #tpu.dot_dimension_numbers<[1], [0], [0], [1], [0, 0, 1, 1], [], []>} : vector<16x32xbf16>, vector<32x96xbf16>, vector<16x96xf32> -> vector<16x96xf32>
    %c0_3 = arith.constant 0 : index
    %c0_4 = arith.constant 0 : index
    %4 = vector.load %arg4[%c0_3, %c0_4] : memref<1x96xf32, #tpu.memory_space<vmem>>, vector<1x96xf32>
    %5 = vector.broadcast %4 : vector<1x96xf32> to vector<16x96xf32>
    %6 = arith.addf %3, %5 : vector<16x96xf32>
    %7 = arith.truncf %6 : vector<16x96xf32> to vector<16x96xbf16>
    %c0_5 = arith.constant 0 : index
    %c0_6 = arith.constant 0 : index
    %8 = vector.load %arg5[%c0_5, %c0_6] : memref<16x96xbf16, #tpu.memory_space<vmem>>, vector<16x96xbf16>
    tpu.vector_store %arg5[%c0_5, %c0_6], %7 {strides = array<i32>} : memref<16x96xbf16, #tpu.memory_space<vmem>>, vector<16x96xbf16>,
    return
  }
  func.func @transform_0(%arg0: i32, %arg1: i32) -> (i32, i32) {
    %c0_i32 = arith.constant 0 : i32
    %c0_i32_0 = arith.constant 0 : i32
    return %arg0, %c0_i32 : i32, i32
  }
  func.func @transform_1(%arg0: i32, %arg1: i32) -> (i32, i32) {
    %c0_i32 = arith.constant 0 : i32
    %c0_i32_0 = arith.constant 0 : i32
    return %c0_i32, %arg1 : i32, i32
  }
  func.func @transform_2(%arg0: i32, %arg1: i32) -> (i32, i32) {
    %c0_i32 = arith.constant 0 : i32
    %c0_i32_0 = arith.constant 0 : i32
    return %c0_i32, %arg1 : i32, i32
  }
  func.func @transform_3(%arg0: i32, %arg1: i32) -> (i32, i32) {
    %c0_i32 = arith.constant 0 : i32
    return %arg0, %arg1 : i32, i32
  }
}

module attributes {stable_mosaic.version = 11 : i64} {
  func.func @_linear_kernel(%arg0: i32, %arg1: i32, %arg2: memref<16x32xf32, #tpu.memory_space<vmem>>, %arg3: memref<32x64xbf16, #tpu.memory_space<vmem>>, %arg4: memref<1x64xf32, #tpu.memory_space<vmem>>, %arg5: memref<16x64xbf16, #tpu.memory_space<vmem>>) attributes {dimension_semantics = [#tpu.dimension_semantics<parallel>, #tpu.dimension_semantics<parallel>], iteration_bounds = array<i64: 1, 1>, scalar_prefetch = 0 : i64, scratch_operands = 0 : i64, tpu.core_type = #tpu.core_type<tc>, window_params = [{transform_indices = @transform_0, window_bounds = array<i64: 16, 32>}, {transform_indices = @transform_1, window_bounds = array<i64: 32, 64>}, {transform_indices = @transform_2, window_bounds = array<i64: 1, 64>}, {transform_indices = @transform_3, window_bounds = array<i64: 16, 64>}]} {
    %c0 = arith.constant 0 : index
    %c0_0 = arith.constant 0 : index
    %0 = vector.load %arg2[%c0, %c0_0] : memref<16x32xf32, #tpu.memory_space<vmem>>, vector<16x32xf32>
    %1 = arith.truncf %0 : vector<16x32xf32> to vector<16x32xbf16>
    %c0_1 = arith.constant 0 : index
    %c0_2 = arith.constant 0 : index
    %2 = vector.load %arg3[%c0_1, %c0_2] : memref<32x64xbf16, #tpu.memory_space<vmem>>, vector<32x64xbf16>
    %cst = arith.constant dense<0.000000e+00> : vector<16x64xf32>
    %3 = tpu.matmul %1, %2, %cst {dimension_numbers = #tpu.dot_dimension_numbers<[1], [0], [0], [1], [0, 0, 1, 1], [], []>} : vector<16x32xbf16>, vector<32x64xbf16>, vector<16x64xf32> -> vector<16x64xf32>
    %c0_3 = arith.constant 0 : index
    %c0_4 = arith.constant 0 : index
    %4 = vector.load %arg4[%c0_3, %c0_4] : memref<1x64xf32, #tpu.memory_space<vmem>>, vector<1x64xf32>
    %5 = vector.broadcast %4 : vector<1x64xf32> to vector<16x64xf32>
    %6 = arith.addf %3, %5 : vector<16x64xf32>
    %cst_5 = arith.constant 5.000000e-01 : f32
    %7 = vector.broadcast %cst_5 : f32 to vector<16x64xf32>
    %8 = arith.mulf %7, %6 : vector<16x64xf32>
    %cst_6 = arith.constant 0.707106769 : f32
    %9 = vector.broadcast %cst_6 : f32 to vector<16x64xf32>
    %10 = arith.mulf %6, %9 : vector<16x64xf32>
    %11 = math.erf %10 : vector<16x64xf32>
    %cst_7 = arith.constant 1.000000e+00 : f32
    %12 = vector.broadcast %cst_7 : f32 to vector<16x64xf32>
    %13 = arith.addf %12, %11 : vector<16x64xf32>
    %14 = arith.mulf %8, %13 : vector<16x64xf32>
    %15 = arith.truncf %14 : vector<16x64xf32> to vector<16x64xbf16>
    %c0_8 = arith.constant 0 : index
    %c0_9 = arith.constant 0 : index
    %16 = vector.load %arg5[%c0_8, %c0_9] : memref<16x64xbf16, #tpu.memory_space<vmem>>, vector<16x64xbf16>
    tpu.vector_store %arg5[%c0_8, %c0_9], %15 {strides = array<i32>} : memref<16x64xbf16, #tpu.memory_space<vmem>>, vector<16x64xbf16>,
    return
  }
  func.func @transform_0(%arg0: i32, %arg1: i32) -> (i32, i32) {
    %c0_i32 = arith.constant 0 : i32
    %c0_i32_0 = arith.constant 0 : i32
    return %arg0, %c0_i32 : i32, i32
  }
  func.func @transform_1(%arg0: i32, %arg1: i32) -> (i32, i32) {
    %c0_i32 = arith.constant 0 : i32
    %c0_i32_0 = arith.constant 0 : i32
    return %c0_i32, %arg1 : i32, i32
  }
  func.func @transform_2(%arg0: i32, %arg1: i32) -> (i32, i32) {
    %c0_i32 = arith.constant 0 : i32
    %c0_i32_0 = arith.constant 0 : i32
    return %c0_i32, %arg1 : i32, i32
  }
  func.func @transform_3(%arg0: i32, %arg1: i32) -> (i32, i32) {
    %c0_i32 = arith.constant 0 : i32
    return %arg0, %arg1 : i32, i32
  }
}

module attributes {stable_mosaic.version = 11 : i64} {
  func.func @_linear_ln_kernel(%arg0: i32, %arg1: i32, %arg2: memref<16x64xbf16, #tpu.memory_space<vmem>>, %arg3: memref<64x32xbf16, #tpu.memory_space<vmem>>, %arg4: memref<1x32xf32, #tpu.memory_space<vmem>>, %arg5: memref<16x32xf32, #tpu.memory_space<vmem>>, %arg6: memref<1x32xf32, #tpu.memory_space<vmem>>, %arg7: memref<1x32xf32, #tpu.memory_space<vmem>>, %arg8: memref<16x32xf32, #tpu.memory_space<vmem>>) attributes {dimension_semantics = [#tpu.dimension_semantics<parallel>, #tpu.dimension_semantics<parallel>], iteration_bounds = array<i64: 1, 1>, scalar_prefetch = 0 : i64, scratch_operands = 0 : i64, tpu.core_type = #tpu.core_type<tc>, window_params = [{transform_indices = @transform_0, window_bounds = array<i64: 16, 64>}, {transform_indices = @transform_1, window_bounds = array<i64: 64, 32>}, {transform_indices = @transform_2, window_bounds = array<i64: 1, 32>}, {transform_indices = @transform_3, window_bounds = array<i64: 16, 32>}, {pipeline_mode = #tpu.pipeline_mode<synchronous>, transform_indices = @transform_4, window_bounds = array<i64: 1, 32>}, {pipeline_mode = #tpu.pipeline_mode<synchronous>, transform_indices = @transform_5, window_bounds = array<i64: 1, 32>}, {transform_indices = @transform_6, window_bounds = array<i64: 16, 32>}]} {
    %c0 = arith.constant 0 : index
    %c0_0 = arith.constant 0 : index
    %0 = vector.load %arg2[%c0, %c0_0] : memref<16x64xbf16, #tpu.memory_space<vmem>>, vector<16x64xbf16>
    %c0_1 = arith.constant 0 : index
    %c0_2 = arith.constant 0 : index
    %1 = vector.load %arg3[%c0_1, %c0_2] : memref<64x32xbf16, #tpu.memory_space<vmem>>, vector<64x32xbf16>
    %cst = arith.constant dense<0.000000e+00> : vector<16x32xf32>
    %2 = tpu.matmul %0, %1, %cst {dimension_numbers = #tpu.dot_dimension_numbers<[1], [0], [0], [1], [0, 0, 1, 1], [], []>} : vector<16x64xbf16>, vector<64x32xbf16>, vector<16x32xf32> -> vector<16x32xf32>
    %c0_3 = arith.constant 0 : index
    %c0_4 = arith.constant 0 : index
    %3 = vector.load %arg4[%c0_3, %c0_4] : memref<1x32xf32, #tpu.memory_space<vmem>>, vector<1x32xf32>
    %4 = vector.broadcast %3 : vector<1x32xf32> to vector<16x32xf32>
    %5 = arith.addf %2, %4 : vector<16x32xf32>
    %c0_5 = arith.constant 0 : index
    %c0_6 = arith.constant 0 : index
    %6 = vector.load %arg5[%c0_5, %c0_6] : memref<16x32xf32, #tpu.memory_space<vmem>>, vector<16x32xf32>
    %7 = arith.addf %5, %6 : vector<16x32xf32>
    %cst_7 = arith.constant dense<0.000000e+00> : vector<16xf32>
    %8 = vector.multi_reduction <add>, %7, %cst_7 [1] : vector<16x32xf32> to vector<16xf32>
    %9 = vector.shape_cast %8 : vector<16xf32> to vector<16x1xf32>
    %cst_8 = arith.constant 3.200000e+01 : f32
    %10 = vector.broadcast %cst_8 : f32 to vector<16x1xf32>
    %11 = arith.divf %9, %10 : vector<16x1xf32>
    %12 = vector.broadcast %11 : vector<16x1xf32> to vector<16x32xf32>
    %13 = arith.subf %7, %12 : vector<16x32xf32>
    %14 = arith.mulf %13, %13 : vector<16x32xf32>
    %cst_9 = arith.constant dense<0.000000e+00> : vector<16xf32>
    %15 = vector.multi_reduction <add>, %14, %cst_9 [1] : vector<16x32xf32> to vector<16xf32>
    %16 = vector.shape_cast %15 : vector<16xf32> to vector<16x1xf32>
    %cst_10 = arith.constant 3.200000e+01 : f32
    %17 = vector.broadcast %cst_10 : f32 to vector<16x1xf32>
    %18 = arith.divf %16, %17 : vector<16x1xf32>
    %cst_11 = arith.constant 9.99999996E-13 : f32
    %19 = vector.broadcast %cst_11 : f32 to vector<16x1xf32>
    %20 = arith.addf %18, %19 : vector<16x1xf32>
    %21 = math.rsqrt %20 : vector<16x1xf32>
    %22 = vector.broadcast %21 : vector<16x1xf32> to vector<16x32xf32>
    %23 = arith.mulf %13, %22 : vector<16x32xf32>
    %c0_12 = arith.constant 0 : index
    %c0_13 = arith.constant 0 : index
    %24 = vector.load %arg6[%c0_12, %c0_13] : memref<1x32xf32, #tpu.memory_space<vmem>>, vector<1x32xf32>
    %25 = vector.broadcast %24 : vector<1x32xf32> to vector<16x32xf32>
    %26 = arith.mulf %23, %25 : vector<16x32xf32>
    %c0_14 = arith.constant 0 : index
    %c0_15 = arith.constant 0 : index
    %27 = vector.load %arg7[%c0_14, %c0_15] : memref<1x32xf32, #tpu.memory_space<vmem>>, vector<1x32xf32>
    %28 = vector.broadcast %27 : vector<1x32xf32> to vector<16x32xf32>
    %29 = arith.addf %26, %28 : vector<16x32xf32>
    %c0_16 = arith.constant 0 : index
    %c0_17 = arith.constant 0 : index
    %30 = vector.load %arg8[%c0_16, %c0_17] : memref<16x32xf32, #tpu.memory_space<vmem>>, vector<16x32xf32>
    tpu.vector_store %arg8[%c0_16, %c0_17], %29 {strides = array<i32>} : memref<16x32xf32, #tpu.memory_space<vmem>>, vector<16x32xf32>,
    return
  }
  func.func @transform_0(%arg0: i32, %arg1: i32) -> (i32, i32) {
    %c0_i32 = arith.constant 0 : i32
    %c0_i32_0 = arith.constant 0 : i32
    return %arg0, %c0_i32 : i32, i32
  }
  func.func @transform_1(%arg0: i32, %arg1: i32) -> (i32, i32) {
    %c0_i32 = arith.constant 0 : i32
    %c0_i32_0 = arith.constant 0 : i32
    return %c0_i32, %arg1 : i32, i32
  }
  func.func @transform_2(%arg0: i32, %arg1: i32) -> (i32, i32) {
    %c0_i32 = arith.constant 0 : i32
    %c0_i32_0 = arith.constant 0 : i32
    return %c0_i32, %arg1 : i32, i32
  }
  func.func @transform_3(%arg0: i32, %arg1: i32) -> (i32, i32) {
    %c0_i32 = arith.constant 0 : i32
    %c0_i32_0 = arith.constant 0 : i32
    return %arg0, %c0_i32 : i32, i32
  }
  func.func @transform_4(%arg0: i32, %arg1: i32) -> (i32, i32) {
    %c0_i32 = arith.constant 0 : i32
    %c0_i32_0 = arith.constant 0 : i32
    %c0_i32_1 = arith.constant 0 : i32
    return %c0_i32, %c0_i32_0 : i32, i32
  }
  func.func @transform_5(%arg0: i32, %arg1: i32) -> (i32, i32) {
    %c0_i32 = arith.constant 0 : i32
    %c0_i32_0 = arith.constant 0 : i32
    %c0_i32_1 = arith.constant 0 : i32
    return %c0_i32, %c0_i32_0 : i32, i32
  }
  func.func @transform_6(%arg0: i32, %arg1: i32) -> (i32, i32) {
    %c0_i32 = arith.constant 0 : i32
    return %arg0, %arg1 : i32, i32
  }
}

module attributes {stable_mosaic.version = 11 : i64} {
  func.func @_linear_ln_kernel(%arg0: i32, %arg1: i32, %arg2: memref<16x64xbf16, #tpu.memory_space<vmem>>, %arg3: memref<64x32xbf16, #tpu.memory_space<vmem>>, %arg4: memref<1x32xf32, #tpu.memory_space<vmem>>, %arg5: memref<16x32xf32, #tpu.memory_space<vmem>>, %arg6: memref<1x32xf32, #tpu.memory_space<vmem>>, %arg7: memref<1x32xf32, #tpu.memory_space<vmem>>, %arg8: memref<16x32xf32, #tpu.memory_space<vmem>>) attributes {dimension_semantics = [#tpu.dimension_semantics<parallel>, #tpu.dimension_semantics<parallel>], iteration_bounds = array<i64: 1, 1>, scalar_prefetch = 0 : i64, scratch_operands = 0 : i64, tpu.core_type = #tpu.core_type<tc>, window_params = [{transform_indices = @transform_0, window_bounds = array<i64: 16, 64>}, {transform_indices = @transform_1, window_bounds = array<i64: 64, 32>}, {transform_indices = @transform_2, window_bounds = array<i64: 1, 32>}, {transform_indices = @transform_3, window_bounds = array<i64: 16, 32>}, {pipeline_mode = #tpu.pipeline_mode<synchronous>, transform_indices = @transform_4, window_bounds = array<i64: 1, 32>}, {pipeline_mode = #tpu.pipeline_mode<synchronous>, transform_indices = @transform_5, window_bounds = array<i64: 1, 32>}, {transform_indices = @transform_6, window_bounds = array<i64: 16, 32>}]} {
    %c0 = arith.constant 0 : index
    %c0_0 = arith.constant 0 : index
    %0 = vector.load %arg2[%c0, %c0_0] : memref<16x64xbf16, #tpu.memory_space<vmem>>, vector<16x64xbf16>
    %c0_1 = arith.constant 0 : index
    %c0_2 = arith.constant 0 : index
    %1 = vector.load %arg3[%c0_1, %c0_2] : memref<64x32xbf16, #tpu.memory_space<vmem>>, vector<64x32xbf16>
    %cst = arith.constant dense<0.000000e+00> : vector<16x32xf32>
    %2 = tpu.matmul %0, %1, %cst {dimension_numbers = #tpu.dot_dimension_numbers<[1], [0], [0], [1], [0, 0, 1, 1], [], []>} : vector<16x64xbf16>, vector<64x32xbf16>, vector<16x32xf32> -> vector<16x32xf32>
    %c0_3 = arith.constant 0 : index
    %c0_4 = arith.constant 0 : index
    %3 = vector.load %arg4[%c0_3, %c0_4] : memref<1x32xf32, #tpu.memory_space<vmem>>, vector<1x32xf32>
    %4 = vector.broadcast %3 : vector<1x32xf32> to vector<16x32xf32>
    %5 = arith.addf %2, %4 : vector<16x32xf32>
    %c0_5 = arith.constant 0 : index
    %c0_6 = arith.constant 0 : index
    %6 = vector.load %arg5[%c0_5, %c0_6] : memref<16x32xf32, #tpu.memory_space<vmem>>, vector<16x32xf32>
    %7 = arith.addf %5, %6 : vector<16x32xf32>
    %cst_7 = arith.constant dense<0.000000e+00> : vector<16xf32>
    %8 = vector.multi_reduction <add>, %7, %cst_7 [1] : vector<16x32xf32> to vector<16xf32>
    %9 = vector.shape_cast %8 : vector<16xf32> to vector<16x1xf32>
    %cst_8 = arith.constant 3.200000e+01 : f32
    %10 = vector.broadcast %cst_8 : f32 to vector<16x1xf32>
    %11 = arith.divf %9, %10 : vector<16x1xf32>
    %12 = vector.broadcast %11 : vector<16x1xf32> to vector<16x32xf32>
    %13 = arith.subf %7, %12 : vector<16x32xf32>
    %14 = arith.mulf %13, %13 : vector<16x32xf32>
    %cst_9 = arith.constant dense<0.000000e+00> : vector<16xf32>
    %15 = vector.multi_reduction <add>, %14, %cst_9 [1] : vector<16x32xf32> to vector<16xf32>
    %16 = vector.shape_cast %15 : vector<16xf32> to vector<16x1xf32>
    %cst_10 = arith.constant 3.200000e+01 : f32
    %17 = vector.broadcast %cst_10 : f32 to vector<16x1xf32>
    %18 = arith.divf %16, %17 : vector<16x1xf32>
    %cst_11 = arith.constant 9.99999996E-13 : f32
    %19 = vector.broadcast %cst_11 : f32 to vector<16x1xf32>
    %20 = arith.addf %18, %19 : vector<16x1xf32>
    %21 = math.rsqrt %20 : vector<16x1xf32>
    %22 = vector.broadcast %21 : vector<16x1xf32> to vector<16x32xf32>
    %23 = arith.mulf %13, %22 : vector<16x32xf32>
    %c0_12 = arith.constant 0 : index
    %c0_13 = arith.constant 0 : index
    %24 = vector.load %arg6[%c0_12, %c0_13] : memref<1x32xf32, #tpu.memory_space<vmem>>, vector<1x32xf32>
    %25 = vector.broadcast %24 : vector<1x32xf32> to vector<16x32xf32>
    %26 = arith.mulf %23, %25 : vector<16x32xf32>
    %c0_14 = arith.constant 0 : index
    %c0_15 = arith.constant 0 : index
    %27 = vector.load %arg7[%c0_14, %c0_15] : memref<1x32xf32, #tpu.memory_space<vmem>>, vector<1x32xf32>
    %28 = vector.broadcast %27 : vector<1x32xf32> to vector<16x32xf32>
    %29 = arith.addf %26, %28 : vector<16x32xf32>
    %c0_16 = arith.constant 0 : index
    %c0_17 = arith.constant 0 : index
    %30 = vector.load %arg8[%c0_16, %c0_17] : memref<16x32xf32, #tpu.memory_space<vmem>>, vector<16x32xf32>
    tpu.vector_store %arg8[%c0_16, %c0_17], %29 {strides = array<i32>} : memref<16x32xf32, #tpu.memory_space<vmem>>, vector<16x32xf32>,
    return
  }
  func.func @transform_0(%arg0: i32, %arg1: i32) -> (i32, i32) {
    %c0_i32 = arith.constant 0 : i32
    %c0_i32_0 = arith.constant 0 : i32
    return %arg0, %c0_i32 : i32, i32
  }
  func.func @transform_1(%arg0: i32, %arg1: i32) -> (i32, i32) {
    %c0_i32 = arith.constant 0 : i32
    %c0_i32_0 = arith.constant 0 : i32
    return %c0_i32, %arg1 : i32, i32
  }
  func.func @transform_2(%arg0: i32, %arg1: i32) -> (i32, i32) {
    %c0_i32 = arith.constant 0 : i32
    %c0_i32_0 = arith.constant 0 : i32
    return %c0_i32, %arg1 : i32, i32
  }
  func.func @transform_3(%arg0: i32, %arg1: i32) -> (i32, i32) {
    %c0_i32 = arith.constant 0 : i32
    %c0_i32_0 = arith.constant 0 : i32
    return %arg0, %c0_i32 : i32, i32
  }
  func.func @transform_4(%arg0: i32, %arg1: i32) -> (i32, i32) {
    %c0_i32 = arith.constant 0 : i32
    %c0_i32_0 = arith.constant 0 : i32
    %c0_i32_1 = arith.constant 0 : i32
    return %c0_i32, %c0_i32_0 : i32, i32
  }
  func.func @transform_5(%arg0: i32, %arg1: i32) -> (i32, i32) {
    %c0_i32 = arith.constant 0 : i32
    %c0_i32_0 = arith.constant 0 : i32
    %c0_i32_1 = arith.constant 0 : i32
    return %c0_i32, %c0_i32_0 : i32, i32
  }
  func.func @transform_6(%arg0: i32, %arg1: i32) -> (i32, i32) {
    %c0_i32 = arith.constant 0 : i32
    return %arg0, %arg1 : i32, i32
  }
}

module attributes {stable_mosaic.version = 11 : i64} {
  func.func @_linear_kernel(%arg0: i32, %arg1: i32, %arg2: memref<16x32xf32, #tpu.memory_space<vmem>>, %arg3: memref<32x96xbf16, #tpu.memory_space<vmem>>, %arg4: memref<1x96xf32, #tpu.memory_space<vmem>>, %arg5: memref<16x96xbf16, #tpu.memory_space<vmem>>) attributes {dimension_semantics = [#tpu.dimension_semantics<parallel>, #tpu.dimension_semantics<parallel>], iteration_bounds = array<i64: 1, 1>, scalar_prefetch = 0 : i64, scratch_operands = 0 : i64, tpu.core_type = #tpu.core_type<tc>, window_params = [{transform_indices = @transform_0, window_bounds = array<i64: 16, 32>}, {transform_indices = @transform_1, window_bounds = array<i64: 32, 96>}, {transform_indices = @transform_2, window_bounds = array<i64: 1, 96>}, {transform_indices = @transform_3, window_bounds = array<i64: 16, 96>}]} {
    %c0 = arith.constant 0 : index
    %c0_0 = arith.constant 0 : index
    %0 = vector.load %arg2[%c0, %c0_0] : memref<16x32xf32, #tpu.memory_space<vmem>>, vector<16x32xf32>
    %1 = arith.truncf %0 : vector<16x32xf32> to vector<16x32xbf16>
    %c0_1 = arith.constant 0 : index
    %c0_2 = arith.constant 0 : index
    %2 = vector.load %arg3[%c0_1, %c0_2] : memref<32x96xbf16, #tpu.memory_space<vmem>>, vector<32x96xbf16>
    %cst = arith.constant dense<0.000000e+00> : vector<16x96xf32>
    %3 = tpu.matmul %1, %2, %cst {dimension_numbers = #tpu.dot_dimension_numbers<[1], [0], [0], [1], [0, 0, 1, 1], [], []>} : vector<16x32xbf16>, vector<32x96xbf16>, vector<16x96xf32> -> vector<16x96xf32>
    %c0_3 = arith.constant 0 : index
    %c0_4 = arith.constant 0 : index
    %4 = vector.load %arg4[%c0_3, %c0_4] : memref<1x96xf32, #tpu.memory_space<vmem>>, vector<1x96xf32>
    %5 = vector.broadcast %4 : vector<1x96xf32> to vector<16x96xf32>
    %6 = arith.addf %3, %5 : vector<16x96xf32>
    %7 = arith.truncf %6 : vector<16x96xf32> to vector<16x96xbf16>
    %c0_5 = arith.constant 0 : index
    %c0_6 = arith.constant 0 : index
    %8 = vector.load %arg5[%c0_5, %c0_6] : memref<16x96xbf16, #tpu.memory_space<vmem>>, vector<16x96xbf16>
    tpu.vector_store %arg5[%c0_5, %c0_6], %7 {strides = array<i32>} : memref<16x96xbf16, #tpu.memory_space<vmem>>, vector<16x96xbf16>,
    return
  }
  func.func @transform_0(%arg0: i32, %arg1: i32) -> (i32, i32) {
    %c0_i32 = arith.constant 0 : i32
    %c0_i32_0 = arith.constant 0 : i32
    return %arg0, %c0_i32 : i32, i32
  }
  func.func @transform_1(%arg0: i32, %arg1: i32) -> (i32, i32) {
    %c0_i32 = arith.constant 0 : i32
    %c0_i32_0 = arith.constant 0 : i32
    return %c0_i32, %arg1 : i32, i32
  }
  func.func @transform_2(%arg0: i32, %arg1: i32) -> (i32, i32) {
    %c0_i32 = arith.constant 0 : i32
    %c0_i32_0 = arith.constant 0 : i32
    return %c0_i32, %arg1 : i32, i32
  }
  func.func @transform_3(%arg0: i32, %arg1: i32) -> (i32, i32) {
    %c0_i32 = arith.constant 0 : i32
    return %arg0, %arg1 : i32, i32
  }
}

</mosaic_0001>

<llo_original>
// kernel: canine_encoder_forward.10
$region0: #{canine_encoder_forward.10}
  #allocation0 [shape = 'u32[]', space=smem, size = 0x4, offset = 0x4, fixed_abs, tag = 'smem constant byte address 0x4 - core index']
  #allocation1 [shape = 'u32[72,128]{1,0:T(1,128)}', space=vmem, size = 0x9000, scoped, tag = 'internal scratch']
  %s0 = inlined_call_operand.vmem [shape: f32[16,32], index: 0, kind: input, shape index: {}]
  %s1 = inlined_call_operand.vmem [shape: bf16[32,96], index: 1, kind: input, shape index: {}]
  %s2 = inlined_call_operand.hbm [shape: f32[1,96], index: 2, kind: input, shape index: {}]
  %s3 = inlined_call_operand.vmem [shape: bf16[16,96], index: 3, kind: output, shape index: {}]
  %s4 = sld [smem:[#allocation0]]
  $region26: #{canine_encoder_forward.10} parent=0
    _
  %s6 = ssub.s32 1, %s4
  %s7 = scalar_select 0, %s6, %s4
  $region1: #{canine_encoder_forward.10} parent=0
    #allocation2 [shape = 'u8[512]{0}', space=vmem, size = 0x400, scoped, tag = 'input window, operand 2, single buffered']
    #allocation3 [shape = 's32[1]{0}', space=sflag, size = 0x4, scoped, tag = 'scoped memory for canine_encoder_forward.10']
    %8 = vsyncpa [#allocation3], 0
    // Predicated region
    $region2: #{canine_encoder_forward.10} parent=1 // pred_check
      _
    $region3: #{canine_encoder_forward.10} parent=1 // pred_check_branch
      %10 = sbr.rel (0) target = $region5
    $region4: #{canine_encoder_forward.10} parent=1 // pred_region
      _
    $region5: #{canine_encoder_forward.10} parent=1 // pred_fallthru
      _
    // Predicated region
    $region6: #{canine_encoder_forward.10} parent=1 // pred_check
      _
    $region7: #{canine_encoder_forward.10} parent=1 // pred_check_branch
      %12 = sbr.rel (0) target = $region9
    $region8: #{canine_encoder_forward.10} parent=1 // pred_region
      _
    $region9: #{canine_encoder_forward.10} parent=1 // pred_fallthru
      _
    // Predicated region
    $region10: #{canine_encoder_forward.10} parent=1 // pred_check
      _
    $region11: #{canine_encoder_forward.10} parent=1 // pred_check_branch
      %14 = sbr.rel (0) target = $region13
    $region12: #{canine_encoder_forward.10} parent=1 // pred_region
      %16 = vsyncadd [#allocation3], 0
      %s18 = sshll.u32 %s2, 4
      %s19 = int_to_ptr.hbm [resolvable:$true] %s18
      %s20 = sshll.u32 [#allocation2], 4
      %s21 = int_to_ptr.vmem [resolvable:$true] %s20
      %23 = dma.hbm_to_vmem [thread:$0]  %s19, 16, %s21, [#allocation3]
    $region13: #{canine_encoder_forward.10} parent=1 // pred_fallthru
      _
    // Predicated region
    $region14: #{canine_encoder_forward.10} parent=1 // pred_check
      _
    $region15: #{canine_encoder_forward.10} parent=1 // pred_check_branch
      %25 = sbr.rel (0) target = $region17
    $region16: #{canine_encoder_forward.10} parent=1 // pred_region
      %27 = dma.done [#allocation3], 16
    $region17: #{canine_encoder_forward.10} parent=1 // pred_fallthru
      _
    %v29 = vld [vmem:[%s0] sm:$0xff]
    %v30 = vld [vmem:[%s0 + $0x8] sm:$0xff]
    %v31 = vpack.c.bf16 %v30, %v29
    %v32 = vld [vmem:[%s1] sm:$0xf]
    %v33 = vld [vmem:[%s1 + $0x4] sm:$0xf]
    %v34 = vld [vmem:[%s1 + $0x8] sm:$0xf]
    %v35 = vld [vmem:[%s1 + $0xc] sm:$0xf]
    %v36 = vld [vmem:[#allocation2] sm:$0x1]
    %v38 = vperm.slane %v36, 0
    %v44 = vunpack.c.l.b16 %v32
    %v45 = vunpack.c.l.b16 %v33
    %v46 = vunpack.c.l.b16 %v34
    %v47 = vunpack.c.l.b16 %v35
    %v48 = vpack.c.b16 %v45, %v44
    %v49 = vpack.c.b16 %v47, %v46
    %vm52 = vcmask 261120
    %v54 = vsel %vm52, %v31, 0
    %56 = vmatpush.bf16.msra.mxu0 0
    %57 = vmatpush.bf16.msra.mxu0 0
    %58 = vmatpush.bf16.msra.mxu0 0
    %59 = vmatpush.bf16.msra.mxu0 0
    %60 = vmatpush.bf16.msra.mxu0 0
    %61 = vmatpush.bf16.msra.mxu0 0
    %62 = vmatpush.bf16.msra.mxu0 %v49
    %63 = vmatpush.bf16.msra.mxu0 %v48
    %64 = vmatmul.bf16.gmra.mxu0 %v54
    %v65 = vpop.f32.mrf.mxu0
    %v66 = vadd.f32 %v38, %v65
    %v67 = vpop.f32.mrf.mxu0
    %v68 = vadd.f32 %v38, %v67
    %69 = vdwg.mxu0
    %v70 = vpack.c.bf16 %v66, %v66
    %v71 = vpack.c.bf16 %v68, %v68
    %vm72 = vcmask 781312
    %73 = vst.msk [vmem:[%s3] sm:$0xf] %vm72, %v70
    %74 = vst.msk [vmem:[%s3 + $0x4] sm:$0xf] %vm72, %v71
    // Predicated region
    $region18: #{canine_encoder_forward.10} parent=1 // pred_check
      _
    $region19: #{canine_encoder_forward.10} parent=1 // pred_check_branch
      %76 = sbr.rel (0) target = $region21
    $region20: #{canine_encoder_forward.10} parent=1 // pred_region
      _
    $region21: #{canine_encoder_forward.10} parent=1 // pred_fallthru
      _
    // Predicated region
    $region22: #{canine_encoder_forward.10} parent=1 // pred_check
      _
    $region23: #{canine_encoder_forward.10} parent=1 // pred_check_branch
      %78 = sbr.rel (0) target = $region25
    $region24: #{canine_encoder_forward.10} parent=1 // pred_region
      _
    $region25: #{canine_encoder_forward.10} parent=1 // pred_fallthru
      _
    %79 = vsyncpa [#allocation3], 1

// kernel: canine_encoder_forward.12
$region0: #{canine_encoder_forward.12}
  #allocation0 [shape = 'u32[]', space=smem, size = 0x4, offset = 0x4, fixed_abs, tag = 'smem constant byte address 0x4 - core index']
  #allocation1 [shape = 'u32[72,128]{1,0:T(1,128)}', space=vmem, size = 0x9000, scoped, tag = 'internal scratch']
  %s0 = inlined_call_operand.vmem [shape: bf16[16,32], index: 0, kind: input, shape index: {}]
  %s1 = inlined_call_operand.vmem [shape: bf16[32,32], index: 1, kind: input, shape index: {}]
  %s2 = inlined_call_operand.vmem [shape: f32[1,32], index: 2, kind: input, shape index: {}]
  %s3 = inlined_call_operand.vmem [shape: f32[16,32], index: 3, kind: input, shape index: {}]
  %s4 = inlined_call_operand.vmem [shape: f32[1,32], index: 4, kind: input, shape index: {}]
  %s5 = inlined_call_operand.vmem [shape: f32[1,32], index: 5, kind: input, shape index: {}]
  %s6 = inlined_call_operand.vmem [shape: f32[16,32], index: 6, kind: output, shape index: {}]
  %s7 = sld [smem:[#allocation0]]
  $region34: #{canine_encoder_forward.12} parent=0
    _
  %s9 = ssub.s32 1, %s7
  %s10 = scalar_select 0, %s9, %s7
  // Predicated region
  $region2: #{canine_encoder_forward.12} parent=0 // pred_check
    _
  $region3: #{canine_encoder_forward.12} parent=0 // pred_check_branch
    %12 = sbr.rel (0) target = $region5
  $region4: #{canine_encoder_forward.12} parent=0 // pred_region
    _
  $region5: #{canine_encoder_forward.12} parent=0 // pred_fallthru
    _
  // Predicated region
  $region6: #{canine_encoder_forward.12} parent=0 // pred_check
    _
  $region7: #{canine_encoder_forward.12} parent=0 // pred_check_branch
    %14 = sbr.rel (0) target = $region9
  $region8: #{canine_encoder_forward.12} parent=0 // pred_region
    _
  $region9: #{canine_encoder_forward.12} parent=0 // pred_fallthru
    _
  // Predicated region
  $region10: #{canine_encoder_forward.12} parent=0 // pred_check
    _
  $region11: #{canine_encoder_forward.12} parent=0 // pred_check_branch
    %16 = sbr.rel (0) target = $region13
  $region12: #{canine_encoder_forward.12} parent=0 // pred_region
    _
  $region13: #{canine_encoder_forward.12} parent=0 // pred_fallthru
    _
  // Predicated region
  $region14: #{canine_encoder_forward.12} parent=0 // pred_check
    _
  $region15: #{canine_encoder_forward.12} parent=0 // pred_check_branch
    %18 = sbr.rel (0) target = $region17
  $region16: #{canine_encoder_forward.12} parent=0 // pred_region
    _
  $region17: #{canine_encoder_forward.12} parent=0 // pred_fallthru
    _
  // Predicated region
  $region18: #{canine_encoder_forward.12} parent=0 // pred_check
    _
  $region19: #{canine_encoder_forward.12} parent=0 // pred_check_branch
    %20 = sbr.rel (0) target = $region21
  $region20: #{canine_encoder_forward.12} parent=0 // pred_region
    _
  $region21: #{canine_encoder_forward.12} parent=0 // pred_fallthru
    _
  // Predicated region
  $region22: #{canine_encoder_forward.12} parent=0 // pred_check
    _
  $region23: #{canine_encoder_forward.12} parent=0 // pred_check_branch
    %22 = sbr.rel (0) target = $region25
  $region24: #{canine_encoder_forward.12} parent=0 // pred_region
    _
  $region25: #{canine_encoder_forward.12} parent=0 // pred_fallthru
    _
  %v24 = vld [vmem:[%s0] sm:$0xf]
  %v25 = vld [vmem:[%s0 + $0x4] sm:$0xf]
  %v26 = vld [vmem:[%s1] sm:$0xf]
  %v27 = vld [vmem:[%s1 + $0x4] sm:$0xf]
  %v28 = vld [vmem:[%s1 + $0x8] sm:$0xf]
  %v29 = vld [vmem:[%s1 + $0xc] sm:$0xf]
  %v30 = vld [vmem:[%s2] sm:$0x1]
  %v32 = vperm.slane %v30, 0
  %v36 = vunpack.c.l.b16 %v24
  %v37 = vunpack.c.l.b16 %v25
  %v38 = vpack.c.b16 %v37, %v36
  %v43 = vunpack.c.l.b16 %v26
  %v44 = vunpack.c.l.b16 %v27
  %v45 = vunpack.c.l.b16 %v28
  %v46 = vunpack.c.l.b16 %v29
  %v47 = vpack.c.b16 %v44, %v43
  %v48 = vpack.c.b16 %v46, %v45
  %vm51 = vcmask 261120
  %v53 = vsel %vm51, %v38, 0
  %55 = vmatpush.bf16.msra.mxu0 0
  %56 = vmatpush.bf16.msra.mxu0 0
  %57 = vmatpush.bf16.msra.mxu0 0
  %58 = vmatpush.bf16.msra.mxu0 0
  %59 = vmatpush.bf16.msra.mxu0 0
  %60 = vmatpush.bf16.msra.mxu0 0
  %61 = vmatpush.bf16.msra.mxu0 %v48
  %62 = vmatpush.bf16.msra.mxu0 %v47
  %63 = vmatmul.bf16.gmra.mxu0 %v53
  %v64 = vpop.f32.mrf.mxu0
  %v65 = vadd.f32 %v32, %v64
  %v66 = vpop.f32.mrf.mxu0
  %v67 = vadd.f32 %v32, %v66
  %68 = vdwg.mxu0
  %v69 = vld [vmem:[%s3] sm:$0xff]
  %v70 = vld [vmem:[%s3 + $0x8] sm:$0xff]
  %v71 = vadd.f32 %v65, %v69
  %v72 = vadd.f32 %v67, %v70
  %v73 = vsel %vm51, %v71, 0.0
  %74 = vadd.xlane.f32.xlu0 %v73
  %v75 = vpop.xlane.xlu0 %74
  %v76 = vsel %vm51, %v72, 0.0
  %77 = vadd.xlane.f32.xlu0 %v76
  %v78 = vpop.xlane.xlu0 %77
  %v79 = vrcp.pop 32.0
  %v80 = vmul.f32 32.0, %v79
  %v81 = vsub.f32 1.0, %v80
  %v82 = vmul.f32 %v79, %v81
  %v83 = vadd.f32 %v79, %v82
  %vm84 = vweird.f32 %v79
  %v85 = vsel %vm84, %v79, %v83
  %v86 = vmul.f32 %v75, %v85
  %v87 = vmul.f32 %v78, %v85
  %v88 = vsub.f32 %v71, %v86
  %v89 = vsub.f32 %v72, %v87
  %v90 = vmul.f32 %v88, %v88
  %v91 = vmul.f32 %v89, %v89
  %v92 = vsel %vm51, %v90, 0.0
  %93 = vadd.xlane.f32.xlu0 %v92
  %v94 = vpop.xlane.xlu0 %93
  %v95 = vsel %vm51, %v91, 0.0
  %96 = vadd.xlane.f32.xlu0 %v95
  %v97 = vpop.xlane.xlu0 %96
  %v98 = vmul.f32 %v94, %v85
  %v99 = vmul.f32 %v97, %v85
  %v100 = vadd.f32 %v98, 1e-12
  %v101 = vadd.f32 %v99, 1e-12
  %v102 = vrsqrt.pop %v100
  %v103 = vmul.f32 %v102, %v100
  %v104 = vmul.f32 %v103, %v102
  %v105 = vmul.f32 0.5, %v104
  %v106 = vsub.f32 1.5, %v105
  %v107 = vmul.f32 %v102, %v106
  %vm108 = vweird.f32 %v100
  %vm109 = vweird.f32 %v102
  %vm110 = vmor %vm108, %vm109
  %v111 = vsel %vm110, %v102, %v107
  %v112 = vrsqrt.pop %v101
  %v113 = vmul.f32 %v112, %v101
  %v114 = vmul.f32 %v113, %v112
  %v115 = vmul.f32 0.5, %v114
  %v116 = vsub.f32 1.5, %v115
  %v117 = vmul.f32 %v112, %v116
  %vm118 = vweird.f32 %v101
  %vm119 = vweird.f32 %v112
  %vm120 = vmor %vm118, %vm119
  %v121 = vsel %vm120, %v112, %v117
  %v122 = vmul.f32 %v88, %v111
  %v123 = vmul.f32 %v89, %v121
  %v124 = vld [vmem:[%s4] sm:$0x1]
  %v126 = vperm.slane %v124, 0
  %v128 = vmul.f32 %v122, %v126
  %v129 = vmul.f32 %v123, %v126
  %v130 = vld [vmem:[%s5] sm:$0x1]
  %v132 = vperm.slane %v130, 0
  %v134 = vadd.f32 %v128, %v132
  %v135 = vadd.f32 %v129, %v132
  %136 = vst.msk [vmem:[%s6] sm:$0xff] %vm51, %v134
  %137 = vst.msk [vmem:[%s6 + $0x8] sm:$0xff] %vm51, %v135
  // Predicated region
  $region26: #{canine_encoder_forward.12} parent=0 // pred_check
    _
  $region27: #{canine_encoder_forward.12} parent=0 // pred_check_branch
    %139 = sbr.rel (0) target = $region29
  $region28: #{canine_encoder_forward.12} parent=0 // pred_region
    _
  $region29: #{canine_encoder_forward.12} parent=0 // pred_fallthru
    _
  // Predicated region
  $region30: #{canine_encoder_forward.12} parent=0 // pred_check
    _
  $region31: #{canine_encoder_forward.12} parent=0 // pred_check_branch
    %141 = sbr.rel (0) target = $region33
  $region32: #{canine_encoder_forward.12} parent=0 // pred_region
    _
  $region33: #{canine_encoder_forward.12} parent=0 // pred_fallthru
    _

// kernel: canine_encoder_forward.11
$region0: #{canine_encoder_forward.11}
  #allocation0 [shape = 'u32[]', space=smem, size = 0x4, offset = 0x4, fixed_abs, tag = 'smem constant byte address 0x4 - core index']
  #allocation1 [shape = 'u32[72,128]{1,0:T(1,128)}', space=vmem, size = 0x9000, scoped, tag = 'internal scratch']
  %s0 = inlined_call_operand.vmem [shape: bf16[2,8,96], index: 0, kind: input, shape index: {}]
  %s1 = inlined_call_operand.vmem [shape: f32[2,1,8], index: 1, kind: input, shape index: {}]
  %s2 = inlined_call_operand.vmem [shape: bf16[2,8,32], index: 2, kind: output, shape index: {}]
  %s3 = sld [smem:[#allocation0]]
  $region41: #{canine_encoder_forward.11} parent=0
    _
  %s5 = ssub.s32 1, %s3
  %s6 = scalar_select 0, %s5, %s3
  loop: start=0, step=1, limit=4
  $region2: #{canine_encoder_forward.11} parent=0 // loop_pre_header
    _
  $region3: #{canine_encoder_forward.11} parent=0 // loop_header
    %s8 = sphi 0, %s12
    %p9 = scmp.ge.s32.totalorder %s8, 4
    %s18 = sphi 0, %s20
    %s21 = sphi 0, %s18
    %s22 = sphi 0, %s21
    %s38 = sphi 0, %s22
    %s44 = sphi 0, %s46
    %s47 = sphi 0, %s44
    %s48 = sphi 0, %s47
    %s64 = sphi 0, %s48
    %s70 = sphi 0, %s72
    %s73 = sphi 0, %s70
    %s74 = sphi 0, %s73
    %s90 = sphi 0, %s74
  $region4: #{canine_encoder_forward.11} parent=0 // loop_header_branch
    %11 = sbr.rel (%p9) target = $region8
  $region5: #{canine_encoder_forward.11} parent=0 // loop_body
    %s13 = ssub.s32 %s8, 1
    %s14 = ssub.s32 %s8, 2
    %s15 = sadd.s32 %s8, 1
    %s16 = ssub.s32 %s8, %s15
    %p17 = scmp.eq.s32.totalorder %s16, 0
    %s19 = sadd.s32 %s18, 1
    %s20 = scalar_select %p17, %s18, %s19
    %p23 = pneg %p17
    %p24 = scmp.eq.s32.totalorder %s8, 1
    %p25 = por %p23, %p24
    %p26 = scmp.ne.s32.totalorder %s18, %s21
    %p27 = scmp.eq.s32.totalorder %s8, 0
    %p28 = por %p26, %p27
    %p29 = scmp.ne.s32.totalorder %s18, %s21
    %p30 = scmp.eq.s32.totalorder %s13, 1
    %p31 = por %p29, %p30
    %p32 = scmp.ne.s32.totalorder %s21, %s22
    %p33 = scmp.eq.s32.totalorder %s13, 0
    %p34 = por %p32, %p33
    %p35 = scmp.ne.s32.totalorder %s21, %s22
    %p36 = scmp.eq.s32.totalorder %s14, 1
    %p37 = por %p35, %p36
    %p39 = scmp.ne.s32.totalorder %s22, %s38
    %p40 = scmp.eq.s32.totalorder %s14, 0
    %p41 = por %p39, %p40
    %s42 = ssub.s32 %s8, %s15
    %p43 = scmp.eq.s32.totalorder %s42, 0
    %s45 = sadd.s32 %s44, 1
    %s46 = scalar_select %p43, %s44, %s45
    %p49 = pneg %p43
    %p50 = scmp.eq.s32.totalorder %s8, 1
    %p51 = por %p49, %p50
    %p52 = scmp.ne.s32.totalorder %s44, %s47
    %p53 = scmp.eq.s32.totalorder %s8, 0
    %p54 = por %p52, %p53
    %p55 = scmp.ne.s32.totalorder %s44, %s47
    %p56 = scmp.eq.s32.totalorder %s13, 1
    %p57 = por %p55, %p56
    %p58 = scmp.ne.s32.totalorder %s47, %s48
    %p59 = scmp.eq.s32.totalorder %s13, 0
    %p60 = por %p58, %p59
    %p61 = scmp.ne.s32.totalorder %s47, %s48
    %p62 = scmp.eq.s32.totalorder %s14, 1
    %p63 = por %p61, %p62
    %p65 = scmp.ne.s32.totalorder %s48, %s64
    %p66 = scmp.eq.s32.totalorder %s14, 0
    %p67 = por %p65, %p66
    %s68 = ssub.s32 %s8, %s15
    %p69 = scmp.eq.s32.totalorder %s68, 0
    %s71 = sadd.s32 %s70, 1
    %s72 = scalar_select %p69, %s70, %s71
    %p75 = pneg %p69
    %p76 = scmp.eq.s32.totalorder %s8, 1
    %p77 = por %p75, %p76
    %p78 = scmp.ne.s32.totalorder %s70, %s73
    %p79 = scmp.eq.s32.totalorder %s8, 0
    %p80 = por %p78, %p79
    %p81 = scmp.ne.s32.totalorder %s70, %s73
    %p82 = scmp.eq.s32.totalorder %s13, 1
    %p83 = por %p81, %p82
    %p84 = scmp.ne.s32.totalorder %s73, %s74
    %p85 = scmp.eq.s32.totalorder %s13, 0
    %p86 = por %p84, %p85
    %p87 = scmp.ne.s32.totalorder %s73, %s74
    %p88 = scmp.eq.s32.totalorder %s14, 1
    %p89 = por %p87, %p88
    %p91 = scmp.ne.s32.totalorder %s74, %s90
    %p92 = scmp.eq.s32.totalorder %s14, 0
    %p93 = por %p91, %p92
    %p94 = scmp.le.s32.totalorder 1, %s8
    %p95 = scmp.lt.s32.totalorder %s8, 3
    %p96 = pnand %p94, %p95
    %p97 = pneg %p96
    // Predicated region
    $region9: #{canine_encoder_forward.11} parent=5 // pred_check
      _
    $region10: #{canine_encoder_forward.11} parent=5 // pred_check_branch
      %99 = sbr.rel (%p96) target = $region12
    $region11: #{canine_encoder_forward.11} parent=5 // pred_region
      %s100 = ssub.s32 %s8, 1
    $region12: #{canine_encoder_forward.11} parent=5 // pred_fallthru
      _
    %p101 = scmp.lt.s32.totalorder %s8, 2
    // Predicated region
    $region13: #{canine_encoder_forward.11} parent=5 // pred_check
      %p102 = pneg %p101
    $region14: #{canine_encoder_forward.11} parent=5 // pred_check_branch
      %104 = sbr.rel (%p102) target = $region16
    $region15: #{canine_encoder_forward.11} parent=5 // pred_region
      // Predicated region
      $region17: #{canine_encoder_forward.11} parent=15 // pred_check
        %p105 = pneg %p28
      $region18: #{canine_encoder_forward.11} parent=15 // pred_check_branch
        %107 = sbr.rel (%p105) target = $region20
      $region19: #{canine_encoder_forward.11} parent=15 // pred_region
        %p108 = scmp.lt.s32.totalorder %s8, 1
        %s109 = scalar_select %p108, %s8, 1
        %s110 = smul.addr %s109, 4
        %s111 = scalar_lea.vmem %s0, %s110
      $region20: #{canine_encoder_forward.11} parent=15 // pred_fallthru
        _
      // Predicated region
      $region21: #{canine_encoder_forward.11} parent=15 // pred_check
        %p112 = pneg %p54
      $region22: #{canine_encoder_forward.11} parent=15 // pred_check_branch
        %114 = sbr.rel (%p112) target = $region24
      $region23: #{canine_encoder_forward.11} parent=15 // pred_region
        %p115 = scmp.lt.s32.totalorder %s8, 1
        %s116 = scalar_select %p115, %s8, 1
        %s117 = scalar_lea.vmem %s1, %s116
      $region24: #{canine_encoder_forward.11} parent=15 // pred_fallthru
        _
    $region16: #{canine_encoder_forward.11} parent=5 // pred_fallthru
      _
    %p118 = scmp.le.s32.totalorder 1, %s8
    %p119 = scmp.lt.s32.totalorder %s8, 3
    %p120 = pnand %p118, %p119
    %p121 = pneg %p120
    // Predicated region
    $region25: #{canine_encoder_forward.11} parent=5 // pred_check
      _
    $region26: #{canine_encoder_forward.11} parent=5 // pred_check_branch
      %123 = sbr.rel (%p120) target = $region28
    $region27: #{canine_encoder_forward.11} parent=5 // pred_region
      %s124 = ssub.s32 %s8, 1
      %p125 = scmp.lt.s32.totalorder %s13, 1
      %s126 = scalar_select %p125, %s13, 1
      %s127 = smul.addr %s126, 4
      %s128 = scalar_lea.vmem %s0, %s127
      %p129 = pneg %p34
      %p130 = pneg %p31
      %p131 = scmp.lt.s32.totalorder %s13, 1
      %s132 = scalar_select %p131, %s13, 1
      %s133 = scalar_lea.vmem %s1, %s132
      %p134 = pneg %p60
      %p135 = pneg %p57
      %p136 = pneg %p86
      %p137 = pneg %p83
      %p138 = scmp.lt.s32.totalorder %s13, 1
      %s139 = scalar_select %p138, %s13, 1
      %s140 = smul.addr %s139, 4
      %s141 = scalar_lea.vmem %s2, %s140
      %p142 = scmp.lt.s32.totalorder %s13, 1
      %s143 = scalar_select %p142, %s13, 1
      %s144 = smul.addr %s143, 4
      %s145 = scalar_lea.vmem %s0, %s144
      %p146 = scmp.lt.s32.totalorder %s13, 1
      %s147 = scalar_select %p146, %s13, 1
      %s148 = scalar_lea.vmem %s1, %s147
      %p149 = scmp.lt.s32.totalorder %s13, 1
      %s150 = scalar_select %p149, %s13, 1
      %s151 = smul.addr %s150, 4
      %s152 = scalar_lea.vmem %s2, %s151
      %v154 = vld [vmem:[%s148] sm:$0x1]
      %v155 = vld [vmem:[%s145] sm:$0xf]
      %v157 = vunpack.c.l.b16 %v155
      %v158 = vpack.c.b16 %v157, %v157
      %159 = vrot.lane.b32.xlu0 %v158, 96
      %v160 = vpop.permute.xlu0 %159
      %vm161 = vcmask 64512
      %v163 = vsel %vm161, %v155, 0
      %v166 = vsel %vm161, %v160, 0
      %168 = vmatpush.bf16.xpose.msra.mxu0 0
      %169 = vmatpush.bf16.xpose.msra.mxu0 0
      %170 = vmatpush.bf16.xpose.msra.mxu0 0
      %171 = vmatpush.bf16.xpose.msra.mxu0 0
      %172 = vmatpush.bf16.xpose.msra.mxu0 0
      %173 = vmatpush.bf16.xpose.msra.mxu0 0
      %174 = vmatpush.bf16.xpose.msra.mxu0 0
      %175 = vmatpush.bf16.xpose.msra.mxu0 %v166
      %176 = vmatmul.bf16.gmra.mxu0 %v163
      %v177 = vpop.f32.mrf.mxu0
      %v178 = vadd.f32 0.0, %v177
      %v179 = vpop.f32.mrf.mxu0
      %180 = vdwg.mxu0
      %v181 = vmul.f32 %v178, 0.35355338
      %v183 = vperm.slane %v154, 0
      %v185 = vadd.f32 %v181, %v183
      %v186 = vsel %vm161, %v185, -inf
      %187 = vmax.xlane.f32.xlu0 %v186
      %v188 = vpop.xlane.xlu0 %187
      %v189 = vsub.f32 %v185, %v188
      %v190 = vmul.f32 %v189, 1.442695
      %v191 = vpow.pop %v190
      %v192 = vsel %vm161, %v191, 0.0
      %193 = vadd.xlane.f32.xlu0 %v192
      %v194 = vpop.xlane.xlu0 %193
      %v195 = vpack.c.bf16 %v191, %v191
      %196 = vrot.lane.b32.xlu0 %v158, 64
      %v197 = vpop.permute.xlu0 %196
      %v199 = vsel %vm161, %v195, 0
      %vm201 = vcmask 1043456
      %v203 = vsel %vm201, %v197, 0
      %205 = vmatpush.bf16.msra.mxu0 0
      %206 = vmatpush.bf16.msra.mxu0 0
      %207 = vmatpush.bf16.msra.mxu0 0
      %208 = vmatpush.bf16.msra.mxu0 0
      %209 = vmatpush.bf16.msra.mxu0 0
      %210 = vmatpush.bf16.msra.mxu0 0
      %211 = vmatpush.bf16.msra.mxu0 0
      %212 = vmatpush.bf16.msra.mxu0 %v203
      %213 = vmatmul.bf16.gmra.mxu0 %v199
      %v214 = vpop.f32.mrf.mxu0
      %v215 = vadd.f32 0.0, %v214
      %v216 = vpop.f32.mrf.mxu0
      %217 = vdwg.mxu0
      %v218 = vrcp.pop %v194
      %v219 = vmul.f32 %v215, %v218
      %220 = vrot.lane.b32.xlu0 %v158, 120
      %v221 = vpop.permute.xlu0 %220
      %222 = vrot.lane.b32.xlu0 %v158, 88
      %v223 = vpop.permute.xlu0 %222
      %v225 = vsel %vm161, %v221, 0
      %v228 = vsel %vm161, %v223, 0
      %230 = vmatpush.bf16.xpose.msra.mxu0 0
      %231 = vmatpush.bf16.xpose.msra.mxu0 0
      %232 = vmatpush.bf16.xpose.msra.mxu0 0
      %233 = vmatpush.bf16.xpose.msra.mxu0 0
      %234 = vmatpush.bf16.xpose.msra.mxu0 0
      %235 = vmatpush.bf16.xpose.msra.mxu0 0
      %236 = vmatpush.bf16.xpose.msra.mxu0 0
      %237 = vmatpush.bf16.xpose.msra.mxu0 %v228
      %238 = vmatmul.bf16.gmra.mxu0 %v225
      %v239 = vpop.f32.mrf.mxu0
      %v240 = vadd.f32 0.0, %v239
      %v241 = vpop.f32.mrf.mxu0
      %242 = vdwg.mxu0
      %v243 = vmul.f32 %v240, 0.35355338
      %v244 = vadd.f32 %v243, %v183
      %v245 = vsel %vm161, %v244, -inf
      %246 = vmax.xlane.f32.xlu0 %v245
      %v247 = vpop.xlane.xlu0 %246
      %v248 = vsub.f32 %v244, %v247
      %v249 = vmul.f32 %v248, 1.442695
      %v250 = vpow.pop %v249
      %v251 = vsel %vm161, %v250, 0.0
      %252 = vadd.xlane.f32.xlu0 %v251
      %v253 = vpop.xlane.xlu0 %252
      %v254 = vpack.c.bf16 %v250, %v250
      %255 = vrot.lane.b32.xlu0 %v158, 56
      %v256 = vpop.permute.xlu0 %255
      %v258 = vsel %vm161, %v254, 0
      %v261 = vsel %vm201, %v256, 0
      %263 = vmatpush.bf16.msra.mxu0 0
      %264 = vmatpush.bf16.msra.mxu0 0
      %265 = vmatpush.bf16.msra.mxu0 0
      %266 = vmatpush.bf16.msra.mxu0 0
      %267 = vmatpush.bf16.msra.mxu0 0
      %268 = vmatpush.bf16.msra.mxu0 0
      %269 = vmatpush.bf16.msra.mxu0 0
      %270 = vmatpush.bf16.msra.mxu0 %v261
      %271 = vmatmul.bf16.gmra.mxu0 %v258
      %v272 = vpop.f32.mrf.mxu0
      %v273 = vadd.f32 0.0, %v272
      %v274 = vpop.f32.mrf.mxu0
      %275 = vdwg.mxu0
      %v276 = vrcp.pop %v253
      %v277 = vmul.f32 %v273, %v276
      %278 = vrot.lane.b32.xlu0 %v158, 112
      %v279 = vpop.permute.xlu0 %278
      %280 = vrot.lane.b32.xlu0 %v158, 80
      %v281 = vpop.permute.xlu0 %280
      %v283 = vsel %vm161, %v279, 0
      %v286 = vsel %vm161, %v281, 0
      %288 = vmatpush.bf16.xpose.msra.mxu0 0
      %289 = vmatpush.bf16.xpose.msra.mxu0 0
      %290 = vmatpush.bf16.xpose.msra.mxu0 0
      %291 = vmatpush.bf16.xpose.msra.mxu0 0
      %292 = vmatpush.bf16.xpose.msra.mxu0 0
      %293 = vmatpush.bf16.xpose.msra.mxu0 0
      %294 = vmatpush.bf16.xpose.msra.mxu0 0
      %295 = vmatpush.bf16.xpose.msra.mxu0 %v286
      %296 = vmatmul.bf16.gmra.mxu0 %v283
      %v297 = vpop.f32.mrf.mxu0
      %v298 = vadd.f32 0.0, %v297
      %v299 = vpop.f32.mrf.mxu0
      %300 = vdwg.mxu0
      %v301 = vmul.f32 %v298, 0.35355338
      %v302 = vadd.f32 %v301, %v183
      %v303 = vsel %vm161, %v302, -inf
      %304 = vmax.xlane.f32.xlu0 %v303
      %v305 = vpop.xlane.xlu0 %304
      %v306 = vsub.f32 %v302, %v305
      %v307 = vmul.f32 %v306, 1.442695
      %v308 = vpow.pop %v307
      %v309 = vsel %vm161, %v308, 0.0
      %310 = vadd.xlane.f32.xlu0 %v309
      %v311 = vpop.xlane.xlu0 %310
      %v312 = vpack.c.bf16 %v308, %v308
      %313 = vrot.lane.b32.xlu0 %v158, 48
      %v314 = vpop.permute.xlu0 %313
      %v316 = vsel %vm161, %v312, 0
      %v319 = vsel %vm201, %v314, 0
      %321 = vmatpush.bf16.msra.mxu0 0
      %322 = vmatpush.bf16.msra.mxu0 0
      %323 = vmatpush.bf16.msra.mxu0 0
      %324 = vmatpush.bf16.msra.mxu0 0
      %325 = vmatpush.bf16.msra.mxu0 0
      %326 = vmatpush.bf16.msra.mxu0 0
      %327 = vmatpush.bf16.msra.mxu0 0
      %328 = vmatpush.bf16.msra.mxu0 %v319
      %329 = vmatmul.bf16.gmra.mxu0 %v316
      %v330 = vpop.f32.mrf.mxu0
      %v331 = vadd.f32 0.0, %v330
      %v332 = vpop.f32.mrf.mxu0
      %333 = vdwg.mxu0
      %v334 = vrcp.pop %v311
      %v335 = vmul.f32 %v331, %v334
      %336 = vrot.lane.b32.xlu0 %v158, 104
      %v337 = vpop.permute.xlu0 %336
      %338 = vrot.lane.b32.xlu0 %v158, 72
      %v339 = vpop.permute.xlu0 %338
      %v341 = vsel %vm161, %v337, 0
      %v344 = vsel %vm161, %v339, 0
      %346 = vmatpush.bf16.xpose.msra.mxu0 0
      %347 = vmatpush.bf16.xpose.msra.mxu0 0
      %348 = vmatpush.bf16.xpose.msra.mxu0 0
      %349 = vmatpush.bf16.xpose.msra.mxu0 0
      %350 = vmatpush.bf16.xpose.msra.mxu0 0
      %351 = vmatpush.bf16.xpose.msra.mxu0 0
      %352 = vmatpush.bf16.xpose.msra.mxu0 0
      %353 = vmatpush.bf16.xpose.msra.mxu0 %v344
      %354 = vmatmul.bf16.gmra.mxu0 %v341
      %v355 = vpop.f32.mrf.mxu0
      %v356 = vadd.f32 0.0, %v355
      %v357 = vpop.f32.mrf.mxu0
      %358 = vdwg.mxu0
      %v359 = vmul.f32 %v356, 0.35355338
      %v360 = vadd.f32 %v359, %v183
      %v361 = vsel %vm161, %v360, -inf
      %362 = vmax.xlane.f32.xlu0 %v361
      %v363 = vpop.xlane.xlu0 %362
      %v364 = vsub.f32 %v360, %v363
      %v365 = vmul.f32 %v364, 1.442695
      %v366 = vpow.pop %v365
      %v367 = vsel %vm161, %v366, 0.0
      %368 = vadd.xlane.f32.xlu0 %v367
      %v369 = vpop.xlane.xlu0 %368
      %v370 = vpack.c.bf16 %v366, %v366
      %371 = vrot.lane.b32.xlu0 %v158, 40
      %v372 = vpop.permute.xlu0 %371
      %v374 = vsel %vm161, %v370, 0
      %v377 = vsel %vm201, %v372, 0
      %379 = vmatpush.bf16.msra.mxu0 0
      %380 = vmatpush.bf16.msra.mxu0 0
      %381 = vmatpush.bf16.msra.mxu0 0
      %382 = vmatpush.bf16.msra.mxu0 0
      %383 = vmatpush.bf16.msra.mxu0 0
      %384 = vmatpush.bf16.msra.mxu0 0
      %385 = vmatpush.bf16.msra.mxu0 0
      %386 = vmatpush.bf16.msra.mxu0 %v377
      %387 = vmatmul.bf16.gmra.mxu0 %v374
      %v388 = vpop.f32.mrf.mxu0
      %v389 = vadd.f32 0.0, %v388
      %v390 = vpop.f32.mrf.mxu0
      %391 = vdwg.mxu0
      %v392 = vrcp.pop %v369
      %v393 = vmul.f32 %v389, %v392
      %395 = vrot.lane.b32.xlu0 %v277, 8
      %v396 = vpop.permute.xlu0 %395
      %399 = vrot.lane.b32.xlu0 %v335, 16
      %v400 = vpop.permute.xlu0 %399
      %403 = vrot.lane.b32.xlu0 %v393, 24
      %v404 = vpop.permute.xlu0 %403
      %v406 = vsel %vm161, %v219, %v396
      %vm407 = vcmask 130048
      %v408 = vsel %vm407, %v406, %v400
      %vm409 = vcmask 195584
      %v410 = vsel %vm409, %v408, %v404
      %v411 = vpack.c.bf16 %v410, %v410
      %vm412 = vcmask 257024
      %413 = vst.msk [vmem:[%s152] sm:$0xf] %vm412, %v411
      %p414 = scmp.lt.s32.totalorder %s13, 1
      %s415 = scalar_select %p414, %s13, 1
      %s416 = smul.addr %s415, 4
      %s417 = scalar_lea.vmem %s2, %s416
      // Predicated region
      $region29: #{canine_encoder_forward.11} parent=27 // pred_check
        %p418 = pneg %p83
      $region30: #{canine_encoder_forward.11} parent=27 // pred_check_branch
        %420 = sbr.rel (%p418) target = $region32
      $region31: #{canine_encoder_forward.11} parent=27 // pred_region
        _
      $region32: #{canine_encoder_forward.11} parent=27 // pred_fallthru
        _
    $region28: #{canine_encoder_forward.11} parent=5 // pred_fallthru
      _
    %p421 = scmp.le.s32.totalorder 2, %s8
    // Predicated region
    $region33: #{canine_encoder_forward.11} parent=5 // pred_check
      %p422 = pneg %p421
    $region34: #{canine_encoder_forward.11} parent=5 // pred_check_branch
      %424 = sbr.rel (%p422) target = $region36
    $region35: #{canine_encoder_forward.11} parent=5 // pred_region
      %s425 = ssub.s32 %s8, 2
      // Predicated region
      $region37: #{canine_encoder_forward.11} parent=35 // pred_check
        %p426 = pneg %p89
      $region38: #{canine_encoder_forward.11} parent=35 // pred_check_branch
        %428 = sbr.rel (%p426) target = $region40
      $region39: #{canine_encoder_forward.11} parent=35 // pred_region
        %p429 = scmp.lt.s32.totalorder %s14, 1
        %s430 = scalar_select %p429, %s14, 1
        %s431 = smul.addr %s430, 4
        %s432 = scalar_lea.vmem %s2, %s431
      $region40: #{canine_encoder_forward.11} parent=35 // pred_fallthru
        _
    $region36: #{canine_encoder_forward.11} parent=5 // pred_fallthru
      _
  $region6: #{canine_encoder_forward.11} parent=0 // loop_footer
    %s12 = sadd.s32 1, %s8
  $region7: #{canine_encoder_forward.11} parent=0 // loop_footer_branch
    %7 = sbr.rel target = $region3
  $region8: #{canine_encoder_forward.11} parent=0 // loop_exit
    _

// kernel: canine_encoder_forward.13
$region0: #{canine_encoder_forward.13}
  #allocation0 [shape = 'u32[]', space=smem, size = 0x4, offset = 0x4, fixed_abs, tag = 'smem constant byte address 0x4 - core index']
  #allocation1 [shape = 'u32[72,128]{1,0:T(1,128)}', space=vmem, size = 0x9000, scoped, tag = 'internal scratch']
  %s0 = inlined_call_operand.vmem [shape: f32[16,32], index: 0, kind: input, shape index: {}]
  %s1 = inlined_call_operand.vmem [shape: bf16[32,64], index: 1, kind: input, shape index: {}]
  %s2 = inlined_call_operand.vmem [shape: f32[1,64], index: 2, kind: input, shape index: {}]
  %s3 = inlined_call_operand.vmem [shape: bf16[16,64], index: 3, kind: output, shape index: {}]
  %s4 = sld [smem:[#allocation0]]
  $region22: #{canine_encoder_forward.13} parent=0
    _
  %s6 = ssub.s32 1, %s4
  %s7 = scalar_select 0, %s6, %s4
  // Predicated region
  $region2: #{canine_encoder_forward.13} parent=0 // pred_check
    _
  $region3: #{canine_encoder_forward.13} parent=0 // pred_check_branch
    %9 = sbr.rel (0) target = $region5
  $region4: #{canine_encoder_forward.13} parent=0 // pred_region
    _
  $region5: #{canine_encoder_forward.13} parent=0 // pred_fallthru
    _
  // Predicated region
  $region6: #{canine_encoder_forward.13} parent=0 // pred_check
    _
  $region7: #{canine_encoder_forward.13} parent=0 // pred_check_branch
    %11 = sbr.rel (0) target = $region9
  $region8: #{canine_encoder_forward.13} parent=0 // pred_region
    _
  $region9: #{canine_encoder_forward.13} parent=0 // pred_fallthru
    _
  // Predicated region
  $region10: #{canine_encoder_forward.13} parent=0 // pred_check
    _
  $region11: #{canine_encoder_forward.13} parent=0 // pred_check_branch
    %13 = sbr.rel (0) target = $region13
  $region12: #{canine_encoder_forward.13} parent=0 // pred_region
    _
  $region13: #{canine_encoder_forward.13} parent=0 // pred_fallthru
    _
  %v15 = vld [vmem:[%s0] sm:$0xff]
  %v16 = vld [vmem:[%s0 + $0x8] sm:$0xff]
  %v17 = vpack.c.bf16 %v16, %v15
  %v18 = vld [vmem:[%s1] sm:$0xf]
  %v19 = vld [vmem:[%s1 + $0x4] sm:$0xf]
  %v20 = vld [vmem:[%s1 + $0x8] sm:$0xf]
  %v21 = vld [vmem:[%s1 + $0xc] sm:$0xf]
  %v22 = vld [vmem:[%s2] sm:$0x1]
  %v24 = vperm.slane %v22, 0
  %v30 = vunpack.c.l.b16 %v18
  %v31 = vunpack.c.l.b16 %v19
  %v32 = vunpack.c.l.b16 %v20
  %v33 = vunpack.c.l.b16 %v21
  %v34 = vpack.c.b16 %v31, %v30
  %v35 = vpack.c.b16 %v33, %v32
  %vm38 = vcmask 261120
  %v40 = vsel %vm38, %v17, 0
  %42 = vmatpush.bf16.msra.mxu0 0
  %43 = vmatpush.bf16.msra.mxu0 0
  %44 = vmatpush.bf16.msra.mxu0 0
  %45 = vmatpush.bf16.msra.mxu0 0
  %46 = vmatpush.bf16.msra.mxu0 0
  %47 = vmatpush.bf16.msra.mxu0 0
  %48 = vmatpush.bf16.msra.mxu0 %v35
  %49 = vmatpush.bf16.msra.mxu0 %v34
  %50 = vmatmul.bf16.gmra.mxu0 %v40
  %v51 = vpop.f32.mrf.mxu0
  %v52 = vadd.f32 %v24, %v51
  %v53 = vpop.f32.mrf.mxu0
  %v54 = vadd.f32 %v24, %v53
  %55 = vdwg.mxu0
  %v56 = vmul.f32 %v52, 0.5
  %v57 = vmul.f32 %v54, 0.5
  %v58 = vmul.f32 %v52, 0.70710677
  %v59 = vmul.f32 %v54, 0.70710677
  %v60 = vmul.f32 %v58, %v58
  %v61 = vmin.f32 16.0, %v60
  %v62 = vmul.f32 %v61, 2.1237322e-06
  %v63 = vadd.f32 %v62, 0.00028619796
  %v64 = vmul.f32 %v61, %v63
  %v65 = vadd.f32 %v64, 0.0036580483
  %v66 = vmul.f32 %v61, %v65
  %v67 = vadd.f32 %v66, 0.05243302
  %v68 = vmul.f32 %v61, %v67
  %v69 = vadd.f32 %v68, 0.18741608
  %v70 = vmul.f32 %v61, %v69
  %v71 = vadd.f32 %v70, 1.1283791
  %v72 = vmul.f32 %v58, %v71
  %v73 = vmul.f32 %v61, 3.8918573e-05
  %v74 = vadd.f32 %v73, 0.001143296
  %v75 = vmul.f32 %v61, %v74
  %v76 = vadd.f32 %v75, 0.014752088
  %v77 = vmul.f32 %v61, %v76
  %v78 = vadd.f32 %v77, 0.112945676
  %v79 = vmul.f32 %v61, %v78
  %v80 = vadd.f32 %v79, 0.4994258
  %v81 = vmul.f32 %v61, %v80
  %v82 = vadd.f32 %v81, 1.0
  %v83 = vrcp.pop %v82
  %v84 = vmul.f32 %v82, %v83
  %v85 = vsub.f32 1.0, %v84
  %v86 = vmul.f32 %v83, %v85
  %v87 = vadd.f32 %v83, %v86
  %vm88 = vweird.f32 %v82
  %vm89 = vweird.f32 %v83
  %vm90 = vmor %vm88, %vm89
  %v91 = vsel %vm90, %v83, %v87
  %v92 = vand.u32 2147483647, %v82
  %vm93 = vcmp.eq.f32.partialorder %v92, 8.507059e+37
  %v94 = vand.u32 %v82, 2147483648
  %v95 = vor.u32 1.1754944e-38, %v94
  %v96 = vsel %vm93, %v95, %v91
  %v97 = vmul.f32 %v72, %v96
  %v98 = vmin.f32 %v97, 1.0
  %v99 = vmax.f32 %v98, -1.0
  %v100 = vmul.f32 %v59, %v59
  %v101 = vmin.f32 16.0, %v100
  %v102 = vmul.f32 %v101, 2.1237322e-06
  %v103 = vadd.f32 %v102, 0.00028619796
  %v104 = vmul.f32 %v101, %v103
  %v105 = vadd.f32 %v104, 0.0036580483
  %v106 = vmul.f32 %v101, %v105
  %v107 = vadd.f32 %v106, 0.05243302
  %v108 = vmul.f32 %v101, %v107
  %v109 = vadd.f32 %v108, 0.18741608
  %v110 = vmul.f32 %v101, %v109
  %v111 = vadd.f32 %v110, 1.1283791
  %v112 = vmul.f32 %v59, %v111
  %v113 = vmul.f32 %v101, 3.8918573e-05
  %v114 = vadd.f32 %v113, 0.001143296
  %v115 = vmul.f32 %v101, %v114
  %v116 = vadd.f32 %v115, 0.014752088
  %v117 = vmul.f32 %v101, %v116
  %v118 = vadd.f32 %v117, 0.112945676
  %v119 = vmul.f32 %v101, %v118
  %v120 = vadd.f32 %v119, 0.4994258
  %v121 = vmul.f32 %v101, %v120
  %v122 = vadd.f32 %v121, 1.0
  %v123 = vrcp.pop %v122
  %v124 = vmul.f32 %v122, %v123
  %v125 = vsub.f32 1.0, %v124
  %v126 = vmul.f32 %v123, %v125
  %v127 = vadd.f32 %v123, %v126
  %vm128 = vweird.f32 %v122
  %vm129 = vweird.f32 %v123
  %vm130 = vmor %vm128, %vm129
  %v131 = vsel %vm130, %v123, %v127
  %v132 = vand.u32 2147483647, %v122
  %vm133 = vcmp.eq.f32.partialorder %v132, 8.507059e+37
  %v134 = vand.u32 %v122, 2147483648
  %v135 = vor.u32 1.1754944e-38, %v134
  %v136 = vsel %vm133, %v135, %v131
  %v137 = vmul.f32 %v112, %v136
  %v138 = vmin.f32 %v137, 1.0
  %v139 = vmax.f32 %v138, -1.0
  %v140 = vadd.f32 %v99, 1.0
  %v141 = vadd.f32 %v139, 1.0
  %v142 = vmul.f32 %v56, %v140
  %v143 = vmul.f32 %v57, %v141
  %v144 = vpack.c.bf16 %v142, %v142
  %v145 = vpack.c.bf16 %v143, %v143
  %vm146 = vcmask 519168
  %147 = vst.msk [vmem:[%s3] sm:$0xf] %vm146, %v144
  %148 = vst.msk [vmem:[%s3 + $0x4] sm:$0xf] %vm146, %v145
  // Predicated region
  $region14: #{canine_encoder_forward.13} parent=0 // pred_check
    _
  $region15: #{canine_encoder_forward.13} parent=0 // pred_check_branch
    %150 = sbr.rel (0) target = $region17
  $region16: #{canine_encoder_forward.13} parent=0 // pred_region
    _
  $region17: #{canine_encoder_forward.13} parent=0 // pred_fallthru
    _
  // Predicated region
  $region18: #{canine_encoder_forward.13} parent=0 // pred_check
    _
  $region19: #{canine_encoder_forward.13} parent=0 // pred_check_branch
    %152 = sbr.rel (0) target = $region21
  $region20: #{canine_encoder_forward.13} parent=0 // pred_region
    _
  $region21: #{canine_encoder_forward.13} parent=0 // pred_fallthru
    _

// kernel: canine_encoder_forward.15
$region0: #{canine_encoder_forward.15}
  #allocation0 [shape = 'u32[]', space=smem, size = 0x4, offset = 0x4, fixed_abs, tag = 'smem constant byte address 0x4 - core index']
  #allocation1 [shape = 'u32[72,128]{1,0:T(1,128)}', space=vmem, size = 0x9000, scoped, tag = 'internal scratch']
  %s0 = inlined_call_operand.vmem [shape: f32[16,32], index: 0, kind: input, shape index: {}]
  %s1 = inlined_call_operand.vmem [shape: bf16[32,96], index: 1, kind: input, shape index: {}]
  %s2 = inlined_call_operand.vmem [shape: f32[1,96], index: 2, kind: input, shape index: {}]
  %s3 = inlined_call_operand.vmem [shape: bf16[16,96], index: 3, kind: output, shape index: {}]
  %s4 = sld [smem:[#allocation0]]
  $region22: #{canine_encoder_forward.15} parent=0
    _
  %s6 = ssub.s32 1, %s4
  %s7 = scalar_select 0, %s6, %s4
  // Predicated region
  $region2: #{canine_encoder_forward.15} parent=0 // pred_check
    _
  $region3: #{canine_encoder_forward.15} parent=0 // pred_check_branch
    %9 = sbr.rel (0) target = $region5
  $region4: #{canine_encoder_forward.15} parent=0 // pred_region
    _
  $region5: #{canine_encoder_forward.15} parent=0 // pred_fallthru
    _
  // Predicated region
  $region6: #{canine_encoder_forward.15} parent=0 // pred_check
    _
  $region7: #{canine_encoder_forward.15} parent=0 // pred_check_branch
    %11 = sbr.rel (0) target = $region9
  $region8: #{canine_encoder_forward.15} parent=0 // pred_region
    _
  $region9: #{canine_encoder_forward.15} parent=0 // pred_fallthru
    _
  // Predicated region
  $region10: #{canine_encoder_forward.15} parent=0 // pred_check
    _
  $region11: #{canine_encoder_forward.15} parent=0 // pred_check_branch
    %13 = sbr.rel (0) target = $region13
  $region12: #{canine_encoder_forward.15} parent=0 // pred_region
    _
  $region13: #{canine_encoder_forward.15} parent=0 // pred_fallthru
    _
  %v15 = vld [vmem:[%s0] sm:$0xff]
  %v16 = vld [vmem:[%s0 + $0x8] sm:$0xff]
  %v17 = vpack.c.bf16 %v16, %v15
  %v18 = vld [vmem:[%s1] sm:$0xf]
  %v19 = vld [vmem:[%s1 + $0x4] sm:$0xf]
  %v20 = vld [vmem:[%s1 + $0x8] sm:$0xf]
  %v21 = vld [vmem:[%s1 + $0xc] sm:$0xf]
  %v22 = vld [vmem:[%s2] sm:$0x1]
  %v24 = vperm.slane %v22, 0
  %v30 = vunpack.c.l.b16 %v18
  %v31 = vunpack.c.l.b16 %v19
  %v32 = vunpack.c.l.b16 %v20
  %v33 = vunpack.c.l.b16 %v21
  %v34 = vpack.c.b16 %v31, %v30
  %v35 = vpack.c.b16 %v33, %v32
  %vm38 = vcmask 261120
  %v40 = vsel %vm38, %v17, 0
  %42 = vmatpush.bf16.msra.mxu0 0
  %43 = vmatpush.bf16.msra.mxu0 0
  %44 = vmatpush.bf16.msra.mxu0 0
  %45 = vmatpush.bf16.msra.mxu0 0
  %46 = vmatpush.bf16.msra.mxu0 0
  %47 = vmatpush.bf16.msra.mxu0 0
  %48 = vmatpush.bf16.msra.mxu0 %v35
  %49 = vmatpush.bf16.msra.mxu0 %v34
  %50 = vmatmul.bf16.gmra.mxu0 %v40
  %v51 = vpop.f32.mrf.mxu0
  %v52 = vadd.f32 %v24, %v51
  %v53 = vpop.f32.mrf.mxu0
  %v54 = vadd.f32 %v24, %v53
  %55 = vdwg.mxu0
  %v56 = vpack.c.bf16 %v52, %v52
  %v57 = vpack.c.bf16 %v54, %v54
  %vm58 = vcmask 781312
  %59 = vst.msk [vmem:[%s3] sm:$0xf] %vm58, %v56
  %60 = vst.msk [vmem:[%s3 + $0x4] sm:$0xf] %vm58, %v57
  // Predicated region
  $region14: #{canine_encoder_forward.15} parent=0 // pred_check
    _
  $region15: #{canine_encoder_forward.15} parent=0 // pred_check_branch
    %62 = sbr.rel (0) target = $region17
  $region16: #{canine_encoder_forward.15} parent=0 // pred_region
    _
  $region17: #{canine_encoder_forward.15} parent=0 // pred_fallthru
    _
  // Predicated region
  $region18: #{canine_encoder_forward.15} parent=0 // pred_check
    _
  $region19: #{canine_encoder_forward.15} parent=0 // pred_check_branch
    %64 = sbr.rel (0) target = $region21
  $region20: #{canine_encoder_forward.15} parent=0 // pred_region
    _
  $region21: #{canine_encoder_forward.15} parent=0 // pred_fallthru
    _

// kernel: canine_encoder_forward.19
$region0: #{canine_encoder_forward.19}
  #allocation0 [shape = 'u32[]', space=smem, size = 0x4, offset = 0x4, fixed_abs, tag = 'smem constant byte address 0x4 - core index']
  #allocation1 [shape = 'u32[72,128]{1,0:T(1,128)}', space=vmem, size = 0x9000, scoped, tag = 'internal scratch']
  %s0 = inlined_call_operand.vmem [shape: bf16[16,64], index: 0, kind: input, shape index: {}]
  %s1 = inlined_call_operand.vmem [shape: bf16[64,32], index: 1, kind: input, shape index: {}]
  %s2 = inlined_call_operand.vmem [shape: f32[1,32], index: 2, kind: input, shape index: {}]
  %s3 = inlined_call_operand.vmem [shape: f32[16,32], index: 3, kind: input, shape index: {}]
  %s4 = inlined_call_operand.vmem [shape: f32[1,32], index: 4, kind: input, shape index: {}]
  %s5 = inlined_call_operand.vmem [shape: f32[1,32], index: 5, kind: input, shape index: {}]
  %s6 = inlined_call_operand.hbm [shape: f32[16,32], index: 6, kind: output, shape index: {}]
  %s7 = sld [smem:[#allocation0]]
  $region34: #{canine_encoder_forward.19} parent=0
    _
  %s9 = ssub.s32 1, %s7
  %s10 = scalar_select 0, %s9, %s7
  $region1: #{canine_encoder_forward.19} parent=0
    #allocation2 [shape = 'u8[8192]{0}', space=vmem, size = 0x2000, scoped, tag = 'output window, operand 0, single buffered']
    #allocation3 [shape = 's32[1]{0}', space=sflag, size = 0x4, scoped, tag = 'scoped memory for canine_encoder_forward.19']
    %11 = vsyncpa [#allocation3], 0
    // Predicated region
    $region2: #{canine_encoder_forward.19} parent=1 // pred_check
      _
    $region3: #{canine_encoder_forward.19} parent=1 // pred_check_branch
      %13 = sbr.rel (0) target = $region5
    $region4: #{canine_encoder_forward.19} parent=1 // pred_region
      _
    $region5: #{canine_encoder_forward.19} parent=1 // pred_fallthru
      _
    // Predicated region
    $region6: #{canine_encoder_forward.19} parent=1 // pred_check
      _
    $region7: #{canine_encoder_forward.19} parent=1 // pred_check_branch
      %15 = sbr.rel (0) target = $region9
    $region8: #{canine_encoder_forward.19} parent=1 // pred_region
      _
    $region9: #{canine_encoder_forward.19} parent=1 // pred_fallthru
      _
    // Predicated region
    $region10: #{canine_encoder_forward.19} parent=1 // pred_check
      _
    $region11: #{canine_encoder_forward.19} parent=1 // pred_check_branch
      %17 = sbr.rel (0) target = $region13
    $region12: #{canine_encoder_forward.19} parent=1 // pred_region
      _
    $region13: #{canine_encoder_forward.19} parent=1 // pred_fallthru
      _
    // Predicated region
    $region14: #{canine_encoder_forward.19} parent=1 // pred_check
      _
    $region15: #{canine_encoder_forward.19} parent=1 // pred_check_branch
      %19 = sbr.rel (0) target = $region17
    $region16: #{canine_encoder_forward.19} parent=1 // pred_region
      _
    $region17: #{canine_encoder_forward.19} parent=1 // pred_fallthru
      _
    // Predicated region
    $region18: #{canine_encoder_forward.19} parent=1 // pred_check
      _
    $region19: #{canine_encoder_forward.19} parent=1 // pred_check_branch
      %21 = sbr.rel (0) target = $region21
    $region20: #{canine_encoder_forward.19} parent=1 // pred_region
      _
    $region21: #{canine_encoder_forward.19} parent=1 // pred_fallthru
      _
    // Predicated region
    $region22: #{canine_encoder_forward.19} parent=1 // pred_check
      _
    $region23: #{canine_encoder_forward.19} parent=1 // pred_check_branch
      %23 = sbr.rel (0) target = $region25
    $region24: #{canine_encoder_forward.19} parent=1 // pred_region
      _
    $region25: #{canine_encoder_forward.19} parent=1 // pred_fallthru
      _
    %v25 = vld [vmem:[%s0] sm:$0xf]
    %v26 = vld [vmem:[%s0 + $0x4] sm:$0xf]
    %v27 = vld [vmem:[%s1] sm:$0xf]
    %v28 = vld [vmem:[%s1 + $0x4] sm:$0xf]
    %v29 = vld [vmem:[%s1 + $0x8] sm:$0xf]
    %v30 = vld [vmem:[%s1 + $0xc] sm:$0xf]
    %v31 = vld [vmem:[%s1 + $0x10] sm:$0xf]
    %v32 = vld [vmem:[%s1 + $0x14] sm:$0xf]
    %v33 = vld [vmem:[%s1 + $0x18] sm:$0xf]
    %v34 = vld [vmem:[%s1 + $0x1c] sm:$0xf]
    %v35 = vld [vmem:[%s2] sm:$0x1]
    %v37 = vperm.slane %v35, 0
    %v41 = vunpack.c.l.b16 %v25
    %v42 = vunpack.c.l.b16 %v26
    %v43 = vpack.c.b16 %v42, %v41
    %v52 = vunpack.c.l.b16 %v27
    %v53 = vunpack.c.l.b16 %v28
    %v54 = vunpack.c.l.b16 %v29
    %v55 = vunpack.c.l.b16 %v30
    %v56 = vunpack.c.l.b16 %v31
    %v57 = vunpack.c.l.b16 %v32
    %v58 = vunpack.c.l.b16 %v33
    %v59 = vunpack.c.l.b16 %v34
    %v60 = vpack.c.b16 %v53, %v52
    %v61 = vpack.c.b16 %v55, %v54
    %v62 = vpack.c.b16 %v57, %v56
    %v63 = vpack.c.b16 %v59, %v58
    %vm68 = vcmask 523264
    %v70 = vsel %vm68, %v43, 0
    %72 = vmatpush.bf16.msra.mxu0 0
    %73 = vmatpush.bf16.msra.mxu0 0
    %74 = vmatpush.bf16.msra.mxu0 0
    %75 = vmatpush.bf16.msra.mxu0 0
    %76 = vmatpush.bf16.msra.mxu0 %v63
    %77 = vmatpush.bf16.msra.mxu0 %v62
    %78 = vmatpush.bf16.msra.mxu0 %v61
    %79 = vmatpush.bf16.msra.mxu0 %v60
    %80 = vmatmul.bf16.gmra.mxu0 %v70
    %v81 = vpop.f32.mrf.mxu0
    %v82 = vadd.f32 %v37, %v81
    %v83 = vpop.f32.mrf.mxu0
    %v84 = vadd.f32 %v37, %v83
    %85 = vdwg.mxu0
    %v86 = vld [vmem:[%s3] sm:$0xff]
    %v87 = vld [vmem:[%s3 + $0x8] sm:$0xff]
    %v88 = vadd.f32 %v82, %v86
    %v89 = vadd.f32 %v84, %v87
    %vm90 = vcmask 261120
    %v91 = vsel %vm90, %v88, 0.0
    %92 = vadd.xlane.f32.xlu0 %v91
    %v93 = vpop.xlane.xlu0 %92
    %v94 = vsel %vm90, %v89, 0.0
    %95 = vadd.xlane.f32.xlu0 %v94
    %v96 = vpop.xlane.xlu0 %95
    %v97 = vrcp.pop 32.0
    %v98 = vmul.f32 32.0, %v97
    %v99 = vsub.f32 1.0, %v98
    %v100 = vmul.f32 %v97, %v99
    %v101 = vadd.f32 %v97, %v100
    %vm102 = vweird.f32 %v97
    %v103 = vsel %vm102, %v97, %v101
    %v104 = vmul.f32 %v93, %v103
    %v105 = vmul.f32 %v96, %v103
    %v106 = vsub.f32 %v88, %v104
    %v107 = vsub.f32 %v89, %v105
    %v108 = vmul.f32 %v106, %v106
    %v109 = vmul.f32 %v107, %v107
    %v110 = vsel %vm90, %v108, 0.0
    %111 = vadd.xlane.f32.xlu0 %v110
    %v112 = vpop.xlane.xlu0 %111
    %v113 = vsel %vm90, %v109, 0.0
    %114 = vadd.xlane.f32.xlu0 %v113
    %v115 = vpop.xlane.xlu0 %114
    %v116 = vmul.f32 %v112, %v103
    %v117 = vmul.f32 %v115, %v103
    %v118 = vadd.f32 %v116, 1e-12
    %v119 = vadd.f32 %v117, 1e-12
    %v120 = vrsqrt.pop %v118
    %v121 = vmul.f32 %v120, %v118
    %v122 = vmul.f32 %v121, %v120
    %v123 = vmul.f32 0.5, %v122
    %v124 = vsub.f32 1.5, %v123
    %v125 = vmul.f32 %v120, %v124
    %vm126 = vweird.f32 %v118
    %vm127 = vweird.f32 %v120
    %vm128 = vmor %vm126, %vm127
    %v129 = vsel %vm128, %v120, %v125
    %v130 = vrsqrt.pop %v119
    %v131 = vmul.f32 %v130, %v119
    %v132 = vmul.f32 %v131, %v130
    %v133 = vmul.f32 0.5, %v132
    %v134 = vsub.f32 1.5, %v133
    %v135 = vmul.f32 %v130, %v134
    %vm136 = vweird.f32 %v119
    %vm137 = vweird.f32 %v130
    %vm138 = vmor %vm136, %vm137
    %v139 = vsel %vm138, %v130, %v135
    %v140 = vmul.f32 %v106, %v129
    %v141 = vmul.f32 %v107, %v139
    %v142 = vld [vmem:[%s4] sm:$0x1]
    %v144 = vperm.slane %v142, 0
    %v146 = vmul.f32 %v140, %v144
    %v147 = vmul.f32 %v141, %v144
    %v148 = vld [vmem:[%s5] sm:$0x1]
    %v150 = vperm.slane %v148, 0
    %v152 = vadd.f32 %v146, %v150
    %v153 = vadd.f32 %v147, %v150
    %154 = vst.msk [vmem:[#allocation2] sm:$0xff] %vm90, %v152
    %155 = vst.msk [vmem:[#allocation2 + $0x8] sm:$0xff] %vm90, %v153
    // Predicated region
    $region26: #{canine_encoder_forward.19} parent=1 // pred_check
      _
    $region27: #{canine_encoder_forward.19} parent=1 // pred_check_branch
      %157 = sbr.rel (0) target = $region29
    $region28: #{canine_encoder_forward.19} parent=1 // pred_region
      %159 = vsyncadd [#allocation3], 0
      %s160 = sshll.u32 [#allocation2], 4
      %s161 = int_to_ptr.vmem [resolvable:$true] %s160
      %s162 = sshll.u32 %s6, 4
      %s163 = int_to_ptr.hbm [resolvable:$true] %s162
      %168 = dma.vmem_to_hbm [thread:$0]  %s161, 256, %s163, [#allocation3], 128, 128, 8
    $region29: #{canine_encoder_forward.19} parent=1 // pred_fallthru
      _
    // Predicated region
    $region30: #{canine_encoder_forward.19} parent=1 // pred_check
      _
    $region31: #{canine_encoder_forward.19} parent=1 // pred_check_branch
      %170 = sbr.rel (0) target = $region33
    $region32: #{canine_encoder_forward.19} parent=1 // pred_region
      %172 = dma.done [#allocation3], 256
    $region33: #{canine_encoder_forward.19} parent=1 // pred_fallthru
      _
    %173 = vsyncpa [#allocation3], 1

// kernel: canine_encoder_forward.14
$region0: #{canine_encoder_forward.14}
  #allocation0 [shape = 'u32[]', space=smem, size = 0x4, offset = 0x4, fixed_abs, tag = 'smem constant byte address 0x4 - core index']
  #allocation1 [shape = 'u32[72,128]{1,0:T(1,128)}', space=vmem, size = 0x9000, scoped, tag = 'internal scratch']
  %s0 = inlined_call_operand.vmem [shape: bf16[16,64], index: 0, kind: input, shape index: {}]
  %s1 = inlined_call_operand.vmem [shape: bf16[64,32], index: 1, kind: input, shape index: {}]
  %s2 = inlined_call_operand.vmem [shape: f32[1,32], index: 2, kind: input, shape index: {}]
  %s3 = inlined_call_operand.vmem [shape: f32[16,32], index: 3, kind: input, shape index: {}]
  %s4 = inlined_call_operand.vmem [shape: f32[1,32], index: 4, kind: input, shape index: {}]
  %s5 = inlined_call_operand.vmem [shape: f32[1,32], index: 5, kind: input, shape index: {}]
  %s6 = inlined_call_operand.vmem [shape: f32[16,32], index: 6, kind: output, shape index: {}]
  %s7 = sld [smem:[#allocation0]]
  $region34: #{canine_encoder_forward.14} parent=0
    _
  %s9 = ssub.s32 1, %s7
  %s10 = scalar_select 0, %s9, %s7
  // Predicated region
  $region2: #{canine_encoder_forward.14} parent=0 // pred_check
    _
  $region3: #{canine_encoder_forward.14} parent=0 // pred_check_branch
    %12 = sbr.rel (0) target = $region5
  $region4: #{canine_encoder_forward.14} parent=0 // pred_region
    _
  $region5: #{canine_encoder_forward.14} parent=0 // pred_fallthru
    _
  // Predicated region
  $region6: #{canine_encoder_forward.14} parent=0 // pred_check
    _
  $region7: #{canine_encoder_forward.14} parent=0 // pred_check_branch
    %14 = sbr.rel (0) target = $region9
  $region8: #{canine_encoder_forward.14} parent=0 // pred_region
    _
  $region9: #{canine_encoder_forward.14} parent=0 // pred_fallthru
    _
  // Predicated region
  $region10: #{canine_encoder_forward.14} parent=0 // pred_check
    _
  $region11: #{canine_encoder_forward.14} parent=0 // pred_check_branch
    %16 = sbr.rel (0) target = $region13
  $region12: #{canine_encoder_forward.14} parent=0 // pred_region
    _
  $region13: #{canine_encoder_forward.14} parent=0 // pred_fallthru
    _
  // Predicated region
  $region14: #{canine_encoder_forward.14} parent=0 // pred_check
    _
  $region15: #{canine_encoder_forward.14} parent=0 // pred_check_branch
    %18 = sbr.rel (0) target = $region17
  $region16: #{canine_encoder_forward.14} parent=0 // pred_region
    _
  $region17: #{canine_encoder_forward.14} parent=0 // pred_fallthru
    _
  // Predicated region
  $region18: #{canine_encoder_forward.14} parent=0 // pred_check
    _
  $region19: #{canine_encoder_forward.14} parent=0 // pred_check_branch
    %20 = sbr.rel (0) target = $region21
  $region20: #{canine_encoder_forward.14} parent=0 // pred_region
    _
  $region21: #{canine_encoder_forward.14} parent=0 // pred_fallthru
    _
  // Predicated region
  $region22: #{canine_encoder_forward.14} parent=0 // pred_check
    _
  $region23: #{canine_encoder_forward.14} parent=0 // pred_check_branch
    %22 = sbr.rel (0) target = $region25
  $region24: #{canine_encoder_forward.14} parent=0 // pred_region
    _
  $region25: #{canine_encoder_forward.14} parent=0 // pred_fallthru
    _
  %v24 = vld [vmem:[%s0] sm:$0xf]
  %v25 = vld [vmem:[%s0 + $0x4] sm:$0xf]
  %v26 = vld [vmem:[%s1] sm:$0xf]
  %v27 = vld [vmem:[%s1 + $0x4] sm:$0xf]
  %v28 = vld [vmem:[%s1 + $0x8] sm:$0xf]
  %v29 = vld [vmem:[%s1 + $0xc] sm:$0xf]
  %v30 = vld [vmem:[%s1 + $0x10] sm:$0xf]
  %v31 = vld [vmem:[%s1 + $0x14] sm:$0xf]
  %v32 = vld [vmem:[%s1 + $0x18] sm:$0xf]
  %v33 = vld [vmem:[%s1 + $0x1c] sm:$0xf]
  %v34 = vld [vmem:[%s2] sm:$0x1]
  %v36 = vperm.slane %v34, 0
  %v40 = vunpack.c.l.b16 %v24
  %v41 = vunpack.c.l.b16 %v25
  %v42 = vpack.c.b16 %v41, %v40
  %v51 = vunpack.c.l.b16 %v26
  %v52 = vunpack.c.l.b16 %v27
  %v53 = vunpack.c.l.b16 %v28
  %v54 = vunpack.c.l.b16 %v29
  %v55 = vunpack.c.l.b16 %v30
  %v56 = vunpack.c.l.b16 %v31
  %v57 = vunpack.c.l.b16 %v32
  %v58 = vunpack.c.l.b16 %v33
  %v59 = vpack.c.b16 %v52, %v51
  %v60 = vpack.c.b16 %v54, %v53
  %v61 = vpack.c.b16 %v56, %v55
  %v62 = vpack.c.b16 %v58, %v57
  %vm67 = vcmask 523264
  %v69 = vsel %vm67, %v42, 0
  %71 = vmatpush.bf16.msra.mxu0 0
  %72 = vmatpush.bf16.msra.mxu0 0
  %73 = vmatpush.bf16.msra.mxu0 0
  %74 = vmatpush.bf16.msra.mxu0 0
  %75 = vmatpush.bf16.msra.mxu0 %v62
  %76 = vmatpush.bf16.msra.mxu0 %v61
  %77 = vmatpush.bf16.msra.mxu0 %v60
  %78 = vmatpush.bf16.msra.mxu0 %v59
  %79 = vmatmul.bf16.gmra.mxu0 %v69
  %v80 = vpop.f32.mrf.mxu0
  %v81 = vadd.f32 %v36, %v80
  %v82 = vpop.f32.mrf.mxu0
  %v83 = vadd.f32 %v36, %v82
  %84 = vdwg.mxu0
  %v85 = vld [vmem:[%s3] sm:$0xff]
  %v86 = vld [vmem:[%s3 + $0x8] sm:$0xff]
  %v87 = vadd.f32 %v81, %v85
  %v88 = vadd.f32 %v83, %v86
  %vm89 = vcmask 261120
  %v90 = vsel %vm89, %v87, 0.0
  %91 = vadd.xlane.f32.xlu0 %v90
  %v92 = vpop.xlane.xlu0 %91
  %v93 = vsel %vm89, %v88, 0.0
  %94 = vadd.xlane.f32.xlu0 %v93
  %v95 = vpop.xlane.xlu0 %94
  %v96 = vrcp.pop 32.0
  %v97 = vmul.f32 32.0, %v96
  %v98 = vsub.f32 1.0, %v97
  %v99 = vmul.f32 %v96, %v98
  %v100 = vadd.f32 %v96, %v99
  %vm101 = vweird.f32 %v96
  %v102 = vsel %vm101, %v96, %v100
  %v103 = vmul.f32 %v92, %v102
  %v104 = vmul.f32 %v95, %v102
  %v105 = vsub.f32 %v87, %v103
  %v106 = vsub.f32 %v88, %v104
  %v107 = vmul.f32 %v105, %v105
  %v108 = vmul.f32 %v106, %v106
  %v109 = vsel %vm89, %v107, 0.0
  %110 = vadd.xlane.f32.xlu0 %v109
  %v111 = vpop.xlane.xlu0 %110
  %v112 = vsel %vm89, %v108, 0.0
  %113 = vadd.xlane.f32.xlu0 %v112
  %v114 = vpop.xlane.xlu0 %113
  %v115 = vmul.f32 %v111, %v102
  %v116 = vmul.f32 %v114, %v102
  %v117 = vadd.f32 %v115, 1e-12
  %v118 = vadd.f32 %v116, 1e-12
  %v119 = vrsqrt.pop %v117
  %v120 = vmul.f32 %v119, %v117
  %v121 = vmul.f32 %v120, %v119
  %v122 = vmul.f32 0.5, %v121
  %v123 = vsub.f32 1.5, %v122
  %v124 = vmul.f32 %v119, %v123
  %vm125 = vweird.f32 %v117
  %vm126 = vweird.f32 %v119
  %vm127 = vmor %vm125, %vm126
  %v128 = vsel %vm127, %v119, %v124
  %v129 = vrsqrt.pop %v118
  %v130 = vmul.f32 %v129, %v118
  %v131 = vmul.f32 %v130, %v129
  %v132 = vmul.f32 0.5, %v131
  %v133 = vsub.f32 1.5, %v132
  %v134 = vmul.f32 %v129, %v133
  %vm135 = vweird.f32 %v118
  %vm136 = vweird.f32 %v129
  %vm137 = vmor %vm135, %vm136
  %v138 = vsel %vm137, %v129, %v134
  %v139 = vmul.f32 %v105, %v128
  %v140 = vmul.f32 %v106, %v138
  %v141 = vld [vmem:[%s4] sm:$0x1]
  %v143 = vperm.slane %v141, 0
  %v145 = vmul.f32 %v139, %v143
  %v146 = vmul.f32 %v140, %v143
  %v147 = vld [vmem:[%s5] sm:$0x1]
  %v149 = vperm.slane %v147, 0
  %v151 = vadd.f32 %v145, %v149
  %v152 = vadd.f32 %v146, %v149
  %153 = vst.msk [vmem:[%s6] sm:$0xff] %vm89, %v151
  %154 = vst.msk [vmem:[%s6 + $0x8] sm:$0xff] %vm89, %v152
  // Predicated region
  $region26: #{canine_encoder_forward.14} parent=0 // pred_check
    _
  $region27: #{canine_encoder_forward.14} parent=0 // pred_check_branch
    %156 = sbr.rel (0) target = $region29
  $region28: #{canine_encoder_forward.14} parent=0 // pred_region
    _
  $region29: #{canine_encoder_forward.14} parent=0 // pred_fallthru
    _
  // Predicated region
  $region30: #{canine_encoder_forward.14} parent=0 // pred_check
    _
  $region31: #{canine_encoder_forward.14} parent=0 // pred_check_branch
    %158 = sbr.rel (0) target = $region33
  $region32: #{canine_encoder_forward.14} parent=0 // pred_region
    _
  $region33: #{canine_encoder_forward.14} parent=0 // pred_fallthru
    _

</llo_original>
